<compile_context>
chip_gen: v7x
topology: tpu7x:2x2x1
jax: 0.10.0
libtpu: 0.0.40
codegen_flags: <defaults>
</compile_context>

<pallas_src>
import functools

import jax
import jax.numpy as jnp
from jax.experimental import pallas as pl
from jax.experimental.pallas import tpu as pltpu

NUM_CLASSES = 10
CLASS_PAD = 128          # class axis of the in-VMEM logits slab (lane-dense)
NEG_PAD = -1e9           # bias of padded (non-existent) classes


def _pick_d_block(d):
    # Prefer big D blocks: ~0.35us per grid step and the loop is DMA bound.
    # Even dblk=4096 double-buffered is only ~(8*4096 + 4096*C)*4 bytes per
    # buffer -- far under the 32 MiB scoped VMEM limit on every generation.
    for cand in (4096, 2048, 1024, 512, 256, 128):
        if d % cand == 0:
            return cand
    return d                         # full extent (always legal)


# --------------------------------------------------------------------------
# Fused kernel.
# Grid: (D // dblk,)  -- reduction over the feature dimension ("arbitrary").
# Scratch: logits accumulator [B, 128] f32, Gram accumulator [B, B] f32.
# --------------------------------------------------------------------------
def _pt_fused_kernel(nl, nu, nc, k_top, lr,
                     x_ref, w_ref, b_ref, topk_ref, yl_ref, yu_ref,
                     loss_ref, npseudo_ref, ncorrect_ref,
                     logits_acc, gram_acc):
    d = pl.program_id(0)
    b_rows = logits_acc.shape[0]
    cp = logits_acc.shape[1]

    @pl.when(d == 0)
    def _init():
        logits_acc[...] = jnp.zeros_like(logits_acc)
        gram_acc[...] = jnp.zeros_like(gram_acc)

    # ---- hot D loop: pure DMA + MXU -------------------------------------
    # f32 blocks streamed from HBM, cast to bf16 in VMEM (f32 accumulation).
    x_bf = x_ref[...].astype(jnp.bfloat16)            # [B, dblk]
    w_bf = w_ref[...].astype(jnp.bfloat16)            # [dblk, nc] (un-padded)
    part = jnp.dot(x_bf, w_bf, preferred_element_type=jnp.float32)   # [B, nc]
    logits_acc[:, :nc] = logits_acc[:, :nc] + part
    # Full Gram x.x^T: avoids per-step x_l/x_u slices that straddle the
    # (8,128) sublane tile; the (Nu, Nl) block is sliced once in finalize.
    gram_acc[...] += jax.lax.dot_general(
        x_bf, x_bf, (((1,), (1,)), ((), ())),
        preferred_element_type=jnp.float32)            # [B, B]

    # ---- everything else happens once, on the last D-chunk --------------
    @pl.when(d == pl.num_programs(0) - 1)
    def _finalize():
        # Padded lanes carry NEG_PAD via the bias -> never win max / exp≈0.
        logits = logits_acc[...] + b_ref[...]           # [B, CP] f32
        logits_l = logits[:nl, :]                       # [Nl, CP]
        logits_u = logits[nl:, :]                       # [Nu, CP]
        s_mat = gram_acc[nl:, :nl]                      # [Nu, Nl]

        iota_l = jax.lax.broadcasted_iota(jnp.int32, (nl, cp), 1)
        iota_u = jax.lax.broadcasted_iota(jnp.int32, (nu, cp), 1)
        yl_oh = (iota_l == yl_ref[...]).astype(jnp.float32)   # [Nl, CP]

        # labelled CE of the un-updated model -> cls_loss_org
        m_l = jnp.max(logits_l, axis=-1, keepdims=True)
        lse_l = m_l + jnp.log(jnp.sum(jnp.exp(logits_l - m_l),
                                      axis=-1, keepdims=True))
        picked_l = jnp.sum(logits_l * yl_oh, axis=-1, keepdims=True)  # [Nl,1]
        cls_loss_org = jnp.sum(lse_l - picked_l, keepdims=True) * (1.0 / nl)
        sum_picked = jnp.sum(picked_l, keepdims=True)                 # [1,1]

        # softmax / logsumexp of unlabelled logits (shared by all candidates)
        # exact divide: feeds the analytic SGD step and the accept decision.
        m_u = jnp.max(logits_u, axis=-1, keepdims=True)
        e_u = jnp.exp(logits_u - m_u)
        sum_u = jnp.sum(e_u, axis=-1, keepdims=True)
        p_u = e_u / sum_u                               # [Nu, CP]
        lse_u = m_u + jnp.log(sum_u)                    # [Nu, 1]

        scale = lr * (s_mat + 1.0)                      # [Nu, Nl]
        topk = topk_ref[...]                            # [Nu, K] int32

        inv_nl = 1.0 / nl
        min_val = None
        min_lab = None
        for k in range(k_top):
            lab_k = topk[:, k:k + 1]                                  # [Nu,1]
            c_oh = (iota_u == lab_k).astype(jnp.float32)              # [Nu,CP]
            g_k = p_u - c_oh                                          # [Nu,CP]
            gy_k = jax.lax.dot_general(
                g_k, yl_oh, (((1,), (1,)), ((), ())),
                preferred_element_type=jnp.float32)                   # [Nu,Nl]
            # Batched post-step logits for every (u, l) pair, lane-dense:
            #   new_logits[u,l,:] = logits_l[l] - scale[u,l]*(p_u[u]-onehot_k)
            new_logits = (logits_l[jnp.newaxis, :, :]
                          - scale[:, :, jnp.newaxis] * g_k[:, jnp.newaxis, :])
            m_k = jnp.max(new_logits, axis=-1, keepdims=True)         # [Nu,Nl,1]
            lse_k = m_k + jnp.log(jnp.sum(jnp.exp(new_logits - m_k),
                                          axis=-1, keepdims=True))    # [Nu,Nl,1]
            sum_lse = jnp.sum(lse_k, axis=1)                          # [Nu,1]
            corr = jnp.sum(scale * gy_k, axis=-1, keepdims=True)      # [Nu,1]
            # mean_l CE(new model) - cls_loss_org, picked logit analytic
            delta_k = (sum_lse - sum_picked + corr) * inv_nl - cls_loss_org

            if k == 0:
                min_val, min_lab = delta_k, lab_k
            else:
                # strict '<': first candidate wins ties (matches reference)
                better = delta_k < min_val
                min_val = jnp.where(better, delta_k, min_val)
                min_lab = jnp.where(better, lab_k, min_lab)

        accept = min_val < 0.0                           # [Nu, 1] bool
        accept_f = accept.astype(jnp.float32)
        correct_f = jnp.logical_and(
            accept, min_lab == yu_ref[...]).astype(jnp.float32)

        # F.cross_entropy(outputs, y_pseudo, reduction='none',
        #                 ignore_index=-1).mean(): only accepted unlabelled
        # rows contribute; the divisor is the full batch size B.
        pl_oh = (iota_u == min_lab).astype(jnp.float32)  # [Nu, CP]
        picked_u = jnp.sum(logits_u * pl_oh, axis=-1, keepdims=True)
        ce_u = (lse_u - picked_u) * accept_f             # [Nu, 1]

        loss_ref[...] = jnp.sum(ce_u, keepdims=True) * (1.0 / b_rows)
        npseudo_ref[...] = jnp.sum(accept_f, keepdims=True)
        ncorrect_ref[...] = jnp.sum(correct_f, keepdims=True)


@functools.partial(jax.jit, static_argnames=("lr", "num_classes"))
def pt_forward_fused(x_flat, w, b, topk_u, y_label, y_unlab, *, lr,
                     num_classes):
    B, D = x_flat.shape
    nl = y_label.shape[0]
    nu = y_unlab.shape[0]
    k_top = topk_u.shape[1]
    cp = CLASS_PAD

    # Only the tiny bias is padded to 128 lanes (NEG_PAD on the non-existent
    # classes).  W stays [D, C] in HBM and x / W stay f32 in HBM; the bf16
    # cast happens inside the kernel in VMEM.
    b_pad = jnp.full((1, cp), NEG_PAD, jnp.float32).at[:, :num_classes].set(
        b.reshape(1, num_classes).astype(jnp.float32))
    w_f32 = w.astype(jnp.float32)
    x_f32 = x_flat.astype(jnp.float32)

    yl_col = y_label.reshape(nl, 1).astype(jnp.int32)
    yu_col = y_unlab.reshape(nu, 1).astype(jnp.int32)
    topk_i = topk_u.astype(jnp.int32)

    dblk = _pick_d_block(D)
    grid = (D // dblk,)

    kernel = functools.partial(_pt_fused_kernel, nl, nu, int(num_classes),
                               k_top, float(lr))

    out_shapes = (
        jax.ShapeDtypeStruct((1, 1), jnp.float32),   # loss
        jax.ShapeDtypeStruct((1, 1), jnp.float32),   # #accepted pseudo labels
        jax.ShapeDtypeStruct((1, 1), jnp.float32),   # #correct pseudo labels
    )
    scalar_specs = [pl.BlockSpec((1, 1), lambda d: (0, 0)) for _ in range(3)]

    loss, n_p, n_c = pl.pallas_call(
        kernel,
        out_shape=out_shapes,
        grid_spec=pltpu.PrefetchScalarGridSpec(
            num_scalar_prefetch=0,
            grid=grid,
            in_specs=[
                pl.BlockSpec((B, dblk), lambda d: (0, d)),        # x (f32)
                pl.BlockSpec((dblk, num_classes), lambda d: (d, 0)),  # W (f32)
                pl.BlockSpec((1, cp), lambda d: (0, 0)),          # bias (pad)
                pl.BlockSpec((nu, k_top), lambda d: (0, 0)),      # top-k idx
                pl.BlockSpec((nl, 1), lambda d: (0, 0)),          # y_label
                pl.BlockSpec((nu, 1), lambda d: (0, 0)),          # y_unlab
            ],
            out_specs=scalar_specs,
            scratch_shapes=[
                pltpu.VMEM((B, cp), jnp.float32),                 # logits acc
                pltpu.VMEM((B, B), jnp.float32),                  # Gram acc
            ],
        ),
        compiler_params=pltpu.CompilerParams(
            dimension_semantics=("arbitrary",),
            vmem_limit_bytes=32 * 1024 * 1024,   # safe on v5e/v6e/v7x
        ),
    )(x_f32, w_f32, b_pad, topk_i, yl_col, yu_col)
    return loss[0, 0], n_p[0, 0], n_c[0, 0]


# --------------------------------------------------------------------------
# PT module (forward pass only)
# --------------------------------------------------------------------------
class PT:
    def __init__(self, top_k, optim, lr):
        self.lr = lr
        # TODO(synk): arbitrary torch optimizers / autograd backward have no
        # Pallas equivalent; the per-candidate optimizer step is realised
        # analytically as a single plain-SGD step of the synthetic linear
        # softmax classifier (model.update_batch_stats is a BN toggle and a
        # no-op for a linear model).
        self.optim = optim
        self.top_k = top_k
        self.th = 0.95   # stored but unused in forward (same as reference)

    def forward(self, x, y, model_params, mask, real_target, maximum_val_acc):
        del mask  # only used for buffer shapes in the reference
        w, b = model_params
        num_classes = w.shape[1]
        B = x.shape[0]
        split_idx = real_target.shape[0] // 2
        x_flat = x.reshape(B, -1).astype(jnp.float32)

        # TODO(synk): `maximum_val_acc > 30` is kept as a static Python-level
        # branch (as in the reference).  When it is False the reference's
        # loss is exactly 0 (every target is ignore_index) and no pseudo
        # labels are produced.
        if not (maximum_val_acc > 30):
            return jnp.float32(0.0), jnp.int32(0), jnp.int32(0)

        topk_u = jax.lax.top_k(y, self.top_k)[1][split_idx:]   # [Nu, K]
        y_label = real_target[:split_idx]
        y_unlab = real_target[split_idx:]

        loss, n_pseudo_f, n_correct_f = pt_forward_fused(
            x_flat, w, b, topk_u, y_label, y_unlab,
            lr=self.lr, num_classes=num_classes)
        return (loss,
                n_pseudo_f.astype(jnp.int32),
                n_correct_f.astype(jnp.int32))


if __name__ == "__main__":
    key = jax.random.PRNGKey(0)
    kx, ky, kt, kw = jax.random.split(key, 4)

    B, C_in, H, W_sp = 8, 4, 16, 16
    D = C_in * H * W_sp

    x = jax.random.normal(kx, (B, C_in, H, W_sp), jnp.float32)
    y = jax.random.normal(ky, (B, NUM_CLASSES), jnp.float32)   # teacher scores
    real_target = jax.random.randint(kt, (B,), 0, NUM_CLASSES, jnp.int32)
    mask = jnp.ones((B,), jnp.float32)

    # deterministic synthetic linear model parameters
    w = 0.02 * jax.random.normal(kw, (D, NUM_CLASSES), jnp.float32)
    b = jnp.zeros((1, NUM_CLASSES), jnp.float32)

    pt = PT(top_k=3, optim=None, lr=0.05)
    loss, n_pseudo, n_correct = pt.forward(
        x, y, (w, b), mask, real_target, maximum_val_acc=50.0)
    jax.block_until_ready((loss, n_pseudo, n_correct))
    print("KERNEL_OK")
</pallas_src>

<mosaic_0001>
module attributes {stable_mosaic.version = 11 : i64} {
  func.func @_pt_fused_kernel(%arg0: i32, %arg1: memref<8x1024xf32, #tpu.memory_space<vmem>>, %arg2: memref<1024x10xf32, #tpu.memory_space<vmem>>, %arg3: memref<1x128xf32, #tpu.memory_space<vmem>>, %arg4: memref<4x3xi32, #tpu.memory_space<vmem>>, %arg5: memref<4x1xi32, #tpu.memory_space<vmem>>, %arg6: memref<4x1xi32, #tpu.memory_space<vmem>>, %arg7: memref<1x1xf32, #tpu.memory_space<vmem>>, %arg8: memref<1x1xf32, #tpu.memory_space<vmem>>, %arg9: memref<1x1xf32, #tpu.memory_space<vmem>>, %arg10: memref<8x128xf32, #tpu.memory_space<vmem>>, %arg11: memref<8x8xf32, #tpu.memory_space<vmem>>) attributes {dimension_semantics = [#tpu.dimension_semantics<arbitrary>], iteration_bounds = array<i64: 1>, scalar_prefetch = 0 : i64, scratch_operands = 2 : i64, tpu.core_type = #tpu.core_type<tc>, window_params = [{transform_indices = @transform_0, window_bounds = array<i64: 8, 1024>}, {transform_indices = @transform_1, window_bounds = array<i64: 1024, 10>}, {pipeline_mode = #tpu.pipeline_mode<synchronous>, transform_indices = @transform_2, window_bounds = array<i64: 1, 128>}, {pipeline_mode = #tpu.pipeline_mode<synchronous>, transform_indices = @transform_3, window_bounds = array<i64: 4, 3>}, {pipeline_mode = #tpu.pipeline_mode<synchronous>, transform_indices = @transform_4, window_bounds = array<i64: 4, 1>}, {pipeline_mode = #tpu.pipeline_mode<synchronous>, transform_indices = @transform_5, window_bounds = array<i64: 4, 1>}, {pipeline_mode = #tpu.pipeline_mode<synchronous>, transform_indices = @transform_6, window_bounds = array<i64: 1, 1>}, {pipeline_mode = #tpu.pipeline_mode<synchronous>, transform_indices = @transform_7, window_bounds = array<i64: 1, 1>}, {pipeline_mode = #tpu.pipeline_mode<synchronous>, transform_indices = @transform_8, window_bounds = array<i64: 1, 1>}]} {
    %c0_i32 = arith.constant 0 : i32
    %0 = arith.cmpi eq, %arg0, %c0_i32 : i32
    %1 = arith.extui %0 : i1 to i32
    %c0_i32_0 = arith.constant 0 : i32
    %2 = arith.cmpi ne, %1, %c0_i32_0 : i32
    scf.if %2 {
      %cst_15 = arith.constant 0.000000e+00 : f32
      %18 = vector.broadcast %cst_15 : f32 to vector<8x128xf32>
      %c0_16 = arith.constant 0 : index
      %c0_17 = arith.constant 0 : index
      %19 = vector.load %arg10[%c0_16, %c0_17] : memref<8x128xf32, #tpu.memory_space<vmem>>, vector<8x128xf32>
      tpu.vector_store %arg10[%c0_16, %c0_17], %18 {strides = array<i32>} : memref<8x128xf32, #tpu.memory_space<vmem>>, vector<8x128xf32>,
      %cst_18 = arith.constant 0.000000e+00 : f32
      %20 = vector.broadcast %cst_18 : f32 to vector<8x8xf32>
      %c0_19 = arith.constant 0 : index
      %c0_20 = arith.constant 0 : index
      %21 = vector.load %arg11[%c0_19, %c0_20] : memref<8x8xf32, #tpu.memory_space<vmem>>, vector<8x8xf32>
      tpu.vector_store %arg11[%c0_19, %c0_20], %20 {strides = array<i32>} : memref<8x8xf32, #tpu.memory_space<vmem>>, vector<8x8xf32>,
    } else {
    }
    %c0 = arith.constant 0 : index
    %c0_1 = arith.constant 0 : index
    %3 = vector.load %arg1[%c0, %c0_1] : memref<8x1024xf32, #tpu.memory_space<vmem>>, vector<8x1024xf32>
    %4 = arith.truncf %3 : vector<8x1024xf32> to vector<8x1024xbf16>
    %c0_2 = arith.constant 0 : index
    %c0_3 = arith.constant 0 : index
    %5 = vector.load %arg2[%c0_2, %c0_3] : memref<1024x10xf32, #tpu.memory_space<vmem>>, vector<1024x10xf32>
    %6 = arith.truncf %5 : vector<1024x10xf32> to vector<1024x10xbf16>
    %cst = arith.constant dense<0.000000e+00> : vector<8x10xf32>
    %7 = tpu.matmul %4, %6, %cst {dimension_numbers = #tpu.dot_dimension_numbers<[1], [0], [0], [1], [0, 0, 1, 1], [], []>} : vector<8x1024xbf16>, vector<1024x10xbf16>, vector<8x10xf32> -> vector<8x10xf32>
    %c0_4 = arith.constant 0 : index
    %c0_5 = arith.constant 0 : index
    %8 = vector.load %arg10[%c0_4, %c0_5] : memref<8x128xf32, #tpu.memory_space<vmem>>, vector<8x10xf32>
    %9 = arith.addf %8, %7 : vector<8x10xf32>
    %c0_6 = arith.constant 0 : index
    %c0_7 = arith.constant 0 : index
    %10 = vector.load %arg10[%c0_6, %c0_7] : memref<8x128xf32, #tpu.memory_space<vmem>>, vector<8x10xf32>
    tpu.vector_store %arg10[%c0_6, %c0_7], %9 {strides = array<i32>} : memref<8x128xf32, #tpu.memory_space<vmem>>, vector<8x10xf32>,
    %c0_8 = arith.constant 0 : index
    %c0_9 = arith.constant 0 : index
    %11 = vector.load %arg11[%c0_8, %c0_9] : memref<8x8xf32, #tpu.memory_space<vmem>>, vector<8x8xf32>
    %cst_10 = arith.constant dense<0.000000e+00> : vector<8x8xf32>
    %12 = tpu.matmul %4, %4, %cst_10 {dimension_numbers = #tpu.dot_dimension_numbers<[1], [1], [0], [0], [0, 0, 1, 0], [], []>} : vector<8x1024xbf16>, vector<8x1024xbf16>, vector<8x8xf32> -> vector<8x8xf32>
    %13 = arith.addf %11, %12 : vector<8x8xf32>
    %c0_11 = arith.constant 0 : index
    %c0_12 = arith.constant 0 : index
    %14 = vector.load %arg11[%c0_11, %c0_12] : memref<8x8xf32, #tpu.memory_space<vmem>>, vector<8x8xf32>
    tpu.vector_store %arg11[%c0_11, %c0_12], %13 {strides = array<i32>} : memref<8x8xf32, #tpu.memory_space<vmem>>, vector<8x8xf32>,
    %c0_i32_13 = arith.constant 0 : i32
    %15 = arith.cmpi eq, %arg0, %c0_i32_13 : i32
    %16 = arith.extui %15 : i1 to i32
    %c0_i32_14 = arith.constant 0 : i32
    %17 = arith.cmpi ne, %16, %c0_i32_14 : i32
    scf.if %17 {
      %c0_15 = arith.constant 0 : index
      %c0_16 = arith.constant 0 : index
      %18 = vector.load %arg10[%c0_15, %c0_16] : memref<8x128xf32, #tpu.memory_space<vmem>>, vector<8x128xf32>
      %c0_17 = arith.constant 0 : index
      %c0_18 = arith.constant 0 : index
      %19 = vector.load %arg3[%c0_17, %c0_18] : memref<1x128xf32, #tpu.memory_space<vmem>>, vector<1x128xf32>
      %20 = vector.broadcast %19 : vector<1x128xf32> to vector<8x128xf32>
      %21 = arith.addf %18, %20 : vector<8x128xf32>
      %22 = vector.extract_strided_slice %21 {offsets = [0, 0], sizes = [4, 128], strides = [1, 1]} : vector<8x128xf32> to vector<4x128xf32>
      %23 = vector.extract_strided_slice %21 {offsets = [4, 0], sizes = [4, 128], strides = [1, 1]} : vector<8x128xf32> to vector<4x128xf32>
      %c4 = arith.constant 4 : index
      %c0_19 = arith.constant 0 : index
      %24 = vector.load %arg11[%c4, %c0_19] : memref<8x8xf32, #tpu.memory_space<vmem>>, vector<4x4xf32>
      %25 = tpu.iota {dimensions = array<i32: 1>} : vector<4x128xi32>
      %26 = tpu.iota {dimensions = array<i32: 1>} : vector<4x128xi32>
      %c0_20 = arith.constant 0 : index
      %c0_21 = arith.constant 0 : index
      %27 = vector.load %arg5[%c0_20, %c0_21] : memref<4x1xi32, #tpu.memory_space<vmem>>, vector<4x1xi32>
      %28 = vector.broadcast %27 : vector<4x1xi32> to vector<4x128xi32>
      %29 = arith.cmpi eq, %25, %28 : vector<4x128xi32>
      %30 = arith.extui %29 : vector<4x128xi1> to vector<4x128xi32>
      %31 = arith.sitofp %30 : vector<4x128xi32> to vector<4x128xf32>
      %cst_22 = arith.constant dense<0xFF800000> : vector<4xf32>
      %32 = vector.multi_reduction <maximumf>, %22, %cst_22 [1] : vector<4x128xf32> to vector<4xf32>
      %33 = vector.shape_cast %32 : vector<4xf32> to vector<4x1xf32>
      %34 = vector.broadcast %33 : vector<4x1xf32> to vector<4x128xf32>
      %35 = arith.subf %22, %34 : vector<4x128xf32>
      %36 = math.exp %35 : vector<4x128xf32>
      %cst_23 = arith.constant dense<0.000000e+00> : vector<4xf32>
      %37 = vector.multi_reduction <add>, %36, %cst_23 [1] : vector<4x128xf32> to vector<4xf32>
      %38 = vector.shape_cast %37 : vector<4xf32> to vector<4x1xf32>
      %39 = math.log %38 : vector<4x1xf32>
      %40 = arith.addf %33, %39 : vector<4x1xf32>
      %41 = arith.mulf %22, %31 : vector<4x128xf32>
      %cst_24 = arith.constant dense<0.000000e+00> : vector<4xf32>
      %42 = vector.multi_reduction <add>, %41, %cst_24 [1] : vector<4x128xf32> to vector<4xf32>
      %43 = vector.shape_cast %42 : vector<4xf32> to vector<4x1xf32>
      %44 = arith.subf %40, %43 : vector<4x1xf32>
      %45 = vector.shape_cast %44 : vector<4x1xf32> to vector<1x4x1xf32>
      %cst_25 = arith.constant dense<0.000000e+00> : vector<1xf32>
      %46 = vector.multi_reduction <add>, %45, %cst_25 [1, 2] : vector<1x4x1xf32> to vector<1xf32>
      %47 = vector.shape_cast %46 : vector<1xf32> to vector<1x1x1xf32>
      %48 = vector.extract %47[0, 0, 0] : f32 from vector<1x1x1xf32>
      %49 = vector.broadcast %48 : f32 to vector<1x1xf32>
      %cst_26 = arith.constant 2.500000e-01 : f32
      %50 = vector.broadcast %cst_26 : f32 to vector<1x1xf32>
      %51 = arith.mulf %49, %50 : vector<1x1xf32>
      %52 = vector.shape_cast %43 : vector<4x1xf32> to vector<1x4x1xf32>
      %cst_27 = arith.constant dense<0.000000e+00> : vector<1xf32>
      %53 = vector.multi_reduction <add>, %52, %cst_27 [1, 2] : vector<1x4x1xf32> to vector<1xf32>
      %54 = vector.shape_cast %53 : vector<1xf32> to vector<1x1x1xf32>
      %55 = vector.extract %54[0, 0, 0] : f32 from vector<1x1x1xf32>
      %56 = vector.broadcast %55 : f32 to vector<1x1xf32>
      %cst_28 = arith.constant dense<0xFF800000> : vector<4xf32>
      %57 = vector.multi_reduction <maximumf>, %23, %cst_28 [1] : vector<4x128xf32> to vector<4xf32>
      %58 = vector.shape_cast %57 : vector<4xf32> to vector<4x1xf32>
      %59 = vector.broadcast %58 : vector<4x1xf32> to vector<4x128xf32>
      %60 = arith.subf %23, %59 : vector<4x128xf32>
      %61 = math.exp %60 : vector<4x128xf32>
      %cst_29 = arith.constant dense<0.000000e+00> : vector<4xf32>
      %62 = vector.multi_reduction <add>, %61, %cst_29 [1] : vector<4x128xf32> to vector<4xf32>
      %63 = vector.shape_cast %62 : vector<4xf32> to vector<4x1xf32>
      %64 = vector.broadcast %63 : vector<4x1xf32> to vector<4x128xf32>
      %65 = arith.divf %61, %64 : vector<4x128xf32>
      %66 = math.log %63 : vector<4x1xf32>
      %67 = arith.addf %58, %66 : vector<4x1xf32>
      %cst_30 = arith.constant 1.000000e+00 : f32
      %68 = vector.broadcast %cst_30 : f32 to vector<4x4xf32>
      %69 = arith.addf %24, %68 : vector<4x4xf32>
      %cst_31 = arith.constant 5.000000e-02 : f32
      %70 = vector.broadcast %cst_31 : f32 to vector<4x4xf32>
      %71 = arith.mulf %70, %69 : vector<4x4xf32>
      %c0_32 = arith.constant 0 : index
      %c0_33 = arith.constant 0 : index
      %72 = vector.load %arg4[%c0_32, %c0_33] : memref<4x3xi32, #tpu.memory_space<vmem>>, vector<4x3xi32>
      %73 = vector.extract_strided_slice %72 {offsets = [0, 0], sizes = [4, 1], strides = [1, 1]} : vector<4x3xi32> to vector<4x1xi32>
      %74 = vector.broadcast %73 : vector<4x1xi32> to vector<4x128xi32>
      %75 = arith.cmpi eq, %26, %74 : vector<4x128xi32>
      %76 = arith.extui %75 : vector<4x128xi1> to vector<4x128xi32>
      %77 = arith.sitofp %76 : vector<4x128xi32> to vector<4x128xf32>
      %78 = arith.subf %65, %77 : vector<4x128xf32>
      %cst_34 = arith.constant dense<0.000000e+00> : vector<4x4xf32>
      %79 = tpu.matmul %78, %31, %cst_34 {dimension_numbers = #tpu.dot_dimension_numbers<[1], [1], [0], [0], [0, 0, 1, 0], [], []>} : vector<4x128xf32>, vector<4x128xf32>, vector<4x4xf32> -> vector<4x4xf32>
      %80 = vector.shape_cast %22 : vector<4x128xf32> to vector<1x4x128xf32>
      %81 = vector.shape_cast %71 : vector<4x4xf32> to vector<4x4x1xf32>
      %82 = vector.shape_cast %78 : vector<4x128xf32> to vector<4x1x128xf32>
      %83 = vector.broadcast %81 : vector<4x4x1xf32> to vector<4x4x128xf32>
      %84 = vector.broadcast %82 : vector<4x1x128xf32> to vector<4x4x128xf32>
      %85 = arith.mulf %83, %84 : vector<4x4x128xf32>
      %86 = vector.broadcast %80 : vector<1x4x128xf32> to vector<4x4x128xf32>
      %87 = arith.subf %86, %85 : vector<4x4x128xf32>
      %cst_35 = arith.constant dense<0xFF800000> : vector<4x4xf32>
      %88 = vector.multi_reduction <maximumf>, %87, %cst_35 [2] : vector<4x4x128xf32> to vector<4x4xf32>
      %89 = vector.shape_cast %88 : vector<4x4xf32> to vector<4x4x1xf32>
      %90 = vector.broadcast %89 : vector<4x4x1xf32> to vector<4x4x128xf32>
      %91 = arith.subf %87, %90 : vector<4x4x128xf32>
      %92 = math.exp %91 : vector<4x4x128xf32>
      %cst_36 = arith.constant dense<0.000000e+00> : vector<4x4xf32>
      %93 = vector.multi_reduction <add>, %92, %cst_36 [2] : vector<4x4x128xf32> to vector<4x4xf32>
      %94 = vector.shape_cast %93 : vector<4x4xf32> to vector<4x4x1xf32>
      %95 = math.log %94 : vector<4x4x1xf32>
      %96 = arith.addf %89, %95 : vector<4x4x1xf32>
      %cst_37 = arith.constant dense<0.000000e+00> : vector<4x1xf32>
      %97 = vector.multi_reduction <add>, %96, %cst_37 [1] : vector<4x4x1xf32> to vector<4x1xf32>
      %98 = arith.mulf %71, %79 : vector<4x4xf32>
      %cst_38 = arith.constant dense<0.000000e+00> : vector<4xf32>
      %99 = vector.multi_reduction <add>, %98, %cst_38 [1] : vector<4x4xf32> to vector<4xf32>
      %100 = vector.shape_cast %99 : vector<4xf32> to vector<4x1xf32>
      %101 = vector.broadcast %56 : vector<1x1xf32> to vector<4x1xf32>
      %102 = arith.subf %97, %101 : vector<4x1xf32>
      %103 = arith.addf %102, %100 : vector<4x1xf32>
      %cst_39 = arith.constant 2.500000e-01 : f32
      %104 = vector.broadcast %cst_39 : f32 to vector<4x1xf32>
      %105 = arith.mulf %103, %104 : vector<4x1xf32>
      %106 = vector.broadcast %51 : vector<1x1xf32> to vector<4x1xf32>
      %107 = arith.subf %105, %106 : vector<4x1xf32>
      %108 = vector.extract_strided_slice %72 {offsets = [0, 1], sizes = [4, 1], strides = [1, 1]} : vector<4x3xi32> to vector<4x1xi32>
      %109 = vector.broadcast %108 : vector<4x1xi32> to vector<4x128xi32>
      %110 = arith.cmpi eq, %26, %109 : vector<4x128xi32>
      %111 = arith.extui %110 : vector<4x128xi1> to vector<4x128xi32>
      %112 = arith.sitofp %111 : vector<4x128xi32> to vector<4x128xf32>
      %113 = arith.subf %65, %112 : vector<4x128xf32>
      %cst_40 = arith.constant dense<0.000000e+00> : vector<4x4xf32>
      %114 = tpu.matmul %113, %31, %cst_40 {dimension_numbers = #tpu.dot_dimension_numbers<[1], [1], [0], [0], [0, 0, 1, 0], [], []>} : vector<4x128xf32>, vector<4x128xf32>, vector<4x4xf32> -> vector<4x4xf32>
      %115 = vector.shape_cast %22 : vector<4x128xf32> to vector<1x4x128xf32>
      %116 = vector.shape_cast %71 : vector<4x4xf32> to vector<4x4x1xf32>
      %117 = vector.shape_cast %113 : vector<4x128xf32> to vector<4x1x128xf32>
      %118 = vector.broadcast %116 : vector<4x4x1xf32> to vector<4x4x128xf32>
      %119 = vector.broadcast %117 : vector<4x1x128xf32> to vector<4x4x128xf32>
      %120 = arith.mulf %118, %119 : vector<4x4x128xf32>
      %121 = vector.broadcast %115 : vector<1x4x128xf32> to vector<4x4x128xf32>
      %122 = arith.subf %121, %120 : vector<4x4x128xf32>
      %cst_41 = arith.constant dense<0xFF800000> : vector<4x4xf32>
      %123 = vector.multi_reduction <maximumf>, %122, %cst_41 [2] : vector<4x4x128xf32> to vector<4x4xf32>
      %124 = vector.shape_cast %123 : vector<4x4xf32> to vector<4x4x1xf32>
      %125 = vector.broadcast %124 : vector<4x4x1xf32> to vector<4x4x128xf32>
      %126 = arith.subf %122, %125 : vector<4x4x128xf32>
      %127 = math.exp %126 : vector<4x4x128xf32>
      %cst_42 = arith.constant dense<0.000000e+00> : vector<4x4xf32>
      %128 = vector.multi_reduction <add>, %127, %cst_42 [2] : vector<4x4x128xf32> to vector<4x4xf32>
      %129 = vector.shape_cast %128 : vector<4x4xf32> to vector<4x4x1xf32>
      %130 = math.log %129 : vector<4x4x1xf32>
      %131 = arith.addf %124, %130 : vector<4x4x1xf32>
      %cst_43 = arith.constant dense<0.000000e+00> : vector<4x1xf32>
      %132 = vector.multi_reduction <add>, %131, %cst_43 [1] : vector<4x4x1xf32> to vector<4x1xf32>
      %133 = arith.mulf %71, %114 : vector<4x4xf32>
      %cst_44 = arith.constant dense<0.000000e+00> : vector<4xf32>
      %134 = vector.multi_reduction <add>, %133, %cst_44 [1] : vector<4x4xf32> to vector<4xf32>
      %135 = vector.shape_cast %134 : vector<4xf32> to vector<4x1xf32>
      %136 = vector.broadcast %56 : vector<1x1xf32> to vector<4x1xf32>
      %137 = arith.subf %132, %136 : vector<4x1xf32>
      %138 = arith.addf %137, %135 : vector<4x1xf32>
      %cst_45 = arith.constant 2.500000e-01 : f32
      %139 = vector.broadcast %cst_45 : f32 to vector<4x1xf32>
      %140 = arith.mulf %138, %139 : vector<4x1xf32>
      %141 = vector.broadcast %51 : vector<1x1xf32> to vector<4x1xf32>
      %142 = arith.subf %140, %141 : vector<4x1xf32>
      %143 = arith.cmpf olt, %142, %107 : vector<4x1xf32>
      %144 = arith.select %143, %142, %107 : vector<4x1xi1>, vector<4x1xf32>
      %145 = arith.select %143, %108, %73 : vector<4x1xi1>, vector<4x1xi32>
      %146 = vector.extract_strided_slice %72 {offsets = [0, 2], sizes = [4, 1], strides = [1, 1]} : vector<4x3xi32> to vector<4x1xi32>
      %147 = vector.broadcast %146 : vector<4x1xi32> to vector<4x128xi32>
      %148 = arith.cmpi eq, %26, %147 : vector<4x128xi32>
      %149 = arith.extui %148 : vector<4x128xi1> to vector<4x128xi32>
      %150 = arith.sitofp %149 : vector<4x128xi32> to vector<4x128xf32>
      %151 = arith.subf %65, %150 : vector<4x128xf32>
      %cst_46 = arith.constant dense<0.000000e+00> : vector<4x4xf32>
      %152 = tpu.matmul %151, %31, %cst_46 {dimension_numbers = #tpu.dot_dimension_numbers<[1], [1], [0], [0], [0, 0, 1, 0], [], []>} : vector<4x128xf32>, vector<4x128xf32>, vector<4x4xf32> -> vector<4x4xf32>
      %153 = vector.shape_cast %22 : vector<4x128xf32> to vector<1x4x128xf32>
      %154 = vector.shape_cast %71 : vector<4x4xf32> to vector<4x4x1xf32>
      %155 = vector.shape_cast %151 : vector<4x128xf32> to vector<4x1x128xf32>
      %156 = vector.broadcast %154 : vector<4x4x1xf32> to vector<4x4x128xf32>
      %157 = vector.broadcast %155 : vector<4x1x128xf32> to vector<4x4x128xf32>
      %158 = arith.mulf %156, %157 : vector<4x4x128xf32>
      %159 = vector.broadcast %153 : vector<1x4x128xf32> to vector<4x4x128xf32>
      %160 = arith.subf %159, %158 : vector<4x4x128xf32>
      %cst_47 = arith.constant dense<0xFF800000> : vector<4x4xf32>
      %161 = vector.multi_reduction <maximumf>, %160, %cst_47 [2] : vector<4x4x128xf32> to vector<4x4xf32>
      %162 = vector.shape_cast %161 : vector<4x4xf32> to vector<4x4x1xf32>
      %163 = vector.broadcast %162 : vector<4x4x1xf32> to vector<4x4x128xf32>
      %164 = arith.subf %160, %163 : vector<4x4x128xf32>
      %165 = math.exp %164 : vector<4x4x128xf32>
      %cst_48 = arith.constant dense<0.000000e+00> : vector<4x4xf32>
      %166 = vector.multi_reduction <add>, %165, %cst_48 [2] : vector<4x4x128xf32> to vector<4x4xf32>
      %167 = vector.shape_cast %166 : vector<4x4xf32> to vector<4x4x1xf32>
      %168 = math.log %167 : vector<4x4x1xf32>
      %169 = arith.addf %162, %168 : vector<4x4x1xf32>
      %cst_49 = arith.constant dense<0.000000e+00> : vector<4x1xf32>
      %170 = vector.multi_reduction <add>, %169, %cst_49 [1] : vector<4x4x1xf32> to vector<4x1xf32>
      %171 = arith.mulf %71, %152 : vector<4x4xf32>
      %cst_50 = arith.constant dense<0.000000e+00> : vector<4xf32>
      %172 = vector.multi_reduction <add>, %171, %cst_50 [1] : vector<4x4xf32> to vector<4xf32>
      %173 = vector.shape_cast %172 : vector<4xf32> to vector<4x1xf32>
      %174 = vector.broadcast %56 : vector<1x1xf32> to vector<4x1xf32>
      %175 = arith.subf %170, %174 : vector<4x1xf32>
      %176 = arith.addf %175, %173 : vector<4x1xf32>
      %cst_51 = arith.constant 2.500000e-01 : f32
      %177 = vector.broadcast %cst_51 : f32 to vector<4x1xf32>
      %178 = arith.mulf %176, %177 : vector<4x1xf32>
      %179 = vector.broadcast %51 : vector<1x1xf32> to vector<4x1xf32>
      %180 = arith.subf %178, %179 : vector<4x1xf32>
      %181 = arith.cmpf olt, %180, %144 : vector<4x1xf32>
      %182 = arith.select %181, %180, %144 : vector<4x1xi1>, vector<4x1xf32>
      %183 = arith.select %181, %146, %145 : vector<4x1xi1>, vector<4x1xi32>
      %cst_52 = arith.constant 0.000000e+00 : f32
      %184 = vector.broadcast %cst_52 : f32 to vector<4x1xf32>
      %185 = arith.cmpf olt, %182, %184 : vector<4x1xf32>
      %186 = arith.extui %185 : vector<4x1xi1> to vector<4x1xi32>
      %187 = arith.sitofp %186 : vector<4x1xi32> to vector<4x1xf32>
      %c0_53 = arith.constant 0 : index
      %c0_54 = arith.constant 0 : index
      %188 = vector.load %arg6[%c0_53, %c0_54] : memref<4x1xi32, #tpu.memory_space<vmem>>, vector<4x1xi32>
      %189 = arith.cmpi eq, %183, %188 : vector<4x1xi32>
      %190 = arith.andi %185, %189 : vector<4x1xi1>
      %191 = arith.extui %190 : vector<4x1xi1> to vector<4x1xi32>
      %192 = arith.sitofp %191 : vector<4x1xi32> to vector<4x1xf32>
      %193 = vector.broadcast %183 : vector<4x1xi32> to vector<4x128xi32>
      %194 = arith.cmpi eq, %26, %193 : vector<4x128xi32>
      %195 = arith.extui %194 : vector<4x128xi1> to vector<4x128xi32>
      %196 = arith.sitofp %195 : vector<4x128xi32> to vector<4x128xf32>
      %197 = arith.mulf %23, %196 : vector<4x128xf32>
      %cst_55 = arith.constant dense<0.000000e+00> : vector<4xf32>
      %198 = vector.multi_reduction <add>, %197, %cst_55 [1] : vector<4x128xf32> to vector<4xf32>
      %199 = vector.shape_cast %198 : vector<4xf32> to vector<4x1xf32>
      %200 = arith.subf %67, %199 : vector<4x1xf32>
      %201 = arith.mulf %200, %187 : vector<4x1xf32>
      %202 = vector.shape_cast %201 : vector<4x1xf32> to vector<1x4x1xf32>
      %cst_56 = arith.constant dense<0.000000e+00> : vector<1xf32>
      %203 = vector.multi_reduction <add>, %202, %cst_56 [1, 2] : vector<1x4x1xf32> to vector<1xf32>
      %204 = vector.shape_cast %203 : vector<1xf32> to vector<1x1x1xf32>
      %205 = vector.extract %204[0, 0, 0] : f32 from vector<1x1x1xf32>
      %206 = vector.broadcast %205 : f32 to vector<1x1xf32>
      %cst_57 = arith.constant 1.250000e-01 : f32
      %207 = vector.broadcast %cst_57 : f32 to vector<1x1xf32>
      %208 = arith.mulf %206, %207 : vector<1x1xf32>
      %c0_58 = arith.constant 0 : index
      %c0_59 = arith.constant 0 : index
      %209 = vector.load %arg7[%c0_58, %c0_59] : memref<1x1xf32, #tpu.memory_space<vmem>>, vector<1x1xf32>
      tpu.vector_store %arg7[%c0_58, %c0_59], %208 {strides = array<i32>} : memref<1x1xf32, #tpu.memory_space<vmem>>, vector<1x1xf32>,
      %210 = vector.shape_cast %187 : vector<4x1xf32> to vector<1x4x1xf32>
      %cst_60 = arith.constant dense<0.000000e+00> : vector<1xf32>
      %211 = vector.multi_reduction <add>, %210, %cst_60 [1, 2] : vector<1x4x1xf32> to vector<1xf32>
      %212 = vector.shape_cast %211 : vector<1xf32> to vector<1x1x1xf32>
      %213 = vector.extract %212[0, 0, 0] : f32 from vector<1x1x1xf32>
      %214 = vector.broadcast %213 : f32 to vector<1x1xf32>
      %c0_61 = arith.constant 0 : index
      %c0_62 = arith.constant 0 : index
      %215 = vector.load %arg8[%c0_61, %c0_62] : memref<1x1xf32, #tpu.memory_space<vmem>>, vector<1x1xf32>
      tpu.vector_store %arg8[%c0_61, %c0_62], %214 {strides = array<i32>} : memref<1x1xf32, #tpu.memory_space<vmem>>, vector<1x1xf32>,
      %216 = vector.shape_cast %192 : vector<4x1xf32> to vector<1x4x1xf32>
      %cst_63 = arith.constant dense<0.000000e+00> : vector<1xf32>
      %217 = vector.multi_reduction <add>, %216, %cst_63 [1, 2] : vector<1x4x1xf32> to vector<1xf32>
      %218 = vector.shape_cast %217 : vector<1xf32> to vector<1x1x1xf32>
      %219 = vector.extract %218[0, 0, 0] : f32 from vector<1x1x1xf32>
      %220 = vector.broadcast %219 : f32 to vector<1x1xf32>
      %c0_64 = arith.constant 0 : index
      %c0_65 = arith.constant 0 : index
      %221 = vector.load %arg9[%c0_64, %c0_65] : memref<1x1xf32, #tpu.memory_space<vmem>>, vector<1x1xf32>
      tpu.vector_store %arg9[%c0_64, %c0_65], %220 {strides = array<i32>} : memref<1x1xf32, #tpu.memory_space<vmem>>, vector<1x1xf32>,
    } else {
    }
    return
  }
  func.func @transform_0(%arg0: i32) -> (i32, i32) {
    %c0_i32 = arith.constant 0 : i32
    %c0_i32_0 = arith.constant 0 : i32
    return %c0_i32, %arg0 : i32, i32
  }
  func.func @transform_1(%arg0: i32) -> (i32, i32) {
    %c0_i32 = arith.constant 0 : i32
    %c0_i32_0 = arith.constant 0 : i32
    return %arg0, %c0_i32 : i32, i32
  }
  func.func @transform_2(%arg0: i32) -> (i32, i32) {
    %c0_i32 = arith.constant 0 : i32
    %c0_i32_0 = arith.constant 0 : i32
    %c0_i32_1 = arith.constant 0 : i32
    return %c0_i32, %c0_i32_0 : i32, i32
  }
  func.func @transform_3(%arg0: i32) -> (i32, i32) {
    %c0_i32 = arith.constant 0 : i32
    %c0_i32_0 = arith.constant 0 : i32
    %c0_i32_1 = arith.constant 0 : i32
    return %c0_i32, %c0_i32_0 : i32, i32
  }
  func.func @transform_4(%arg0: i32) -> (i32, i32) {
    %c0_i32 = arith.constant 0 : i32
    %c0_i32_0 = arith.constant 0 : i32
    %c0_i32_1 = arith.constant 0 : i32
    return %c0_i32, %c0_i32_0 : i32, i32
  }
  func.func @transform_5(%arg0: i32) -> (i32, i32) {
    %c0_i32 = arith.constant 0 : i32
    %c0_i32_0 = arith.constant 0 : i32
    %c0_i32_1 = arith.constant 0 : i32
    return %c0_i32, %c0_i32_0 : i32, i32
  }
  func.func @transform_6(%arg0: i32) -> (i32, i32) {
    %c0_i32 = arith.constant 0 : i32
    %c0_i32_0 = arith.constant 0 : i32
    %c0_i32_1 = arith.constant 0 : i32
    return %c0_i32, %c0_i32_0 : i32, i32
  }
  func.func @transform_7(%arg0: i32) -> (i32, i32) {
    %c0_i32 = arith.constant 0 : i32
    %c0_i32_0 = arith.constant 0 : i32
    %c0_i32_1 = arith.constant 0 : i32
    return %c0_i32, %c0_i32_0 : i32, i32
  }
  func.func @transform_8(%arg0: i32) -> (i32, i32) {
    %c0_i32 = arith.constant 0 : i32
    %c0_i32_0 = arith.constant 0 : i32
    %c0_i32_1 = arith.constant 0 : i32
    return %c0_i32, %c0_i32_0 : i32, i32
  }
}

</mosaic_0001>

<llo_original>
// kernel: pt_forward_fused.1
$region0: #{pt_forward_fused.1}
  #allocation0 [shape = 'u32[]', space=smem, size = 0x4, offset = 0x4, fixed_abs, tag = 'smem constant byte address 0x4 - core index']
  #allocation1 [shape = 'u32[144,128]{1,0:T(1,128)}', space=vmem, size = 0x12000, scoped, tag = 'internal scratch']
  #allocation2 [shape = 'f32[8,128]{1,0:T(8,128)}', space=vmem, size = 0x1000, scoped, tag = 'scratch operand']
  #allocation3 [shape = 'f32[8,8]{1,0:T(8,128)}', space=vmem, size = 0x1000, scoped, tag = 'scratch operand']
  %s0 = inlined_call_operand.vmem [shape: f32[8,1024], index: 0, kind: input, shape index: {}]
  %s1 = inlined_call_operand.vmem [shape: f32[1024,10], index: 1, kind: input, shape index: {}]
  %s2 = inlined_call_operand.vmem [shape: f32[1,128], index: 2, kind: input, shape index: {}]
  %s3 = inlined_call_operand.vmem [shape: s32[4,3], index: 3, kind: input, shape index: {}]
  %s4 = inlined_call_operand.vmem [shape: s32[4,1], index: 4, kind: input, shape index: {}]
  %s5 = inlined_call_operand.vmem [shape: s32[4,1], index: 5, kind: input, shape index: {}]
  %s6 = inlined_call_operand.hbm [shape: f32[1,1], index: 6, kind: output, shape index: {0}]
  %s7 = inlined_call_operand.hbm [shape: f32[1,1], index: 7, kind: output, shape index: {1}]
  %s8 = inlined_call_operand.hbm [shape: f32[1,1], index: 8, kind: output, shape index: {2}]
  %9 = xla_tuple %s6, %s7, %s8
  %s10 = sld [smem:[#allocation0]]
  $region58: #{pt_forward_fused.1} parent=0
    _
  %s12 = ssub.s32 1, %s10
  %s13 = scalar_select 0, %s12, %s10
  $region1: #{pt_forward_fused.1} parent=0
    #allocation4 [shape = 'u8[512]{0}', space=vmem, size = 0x400, scoped, tag = 'output window, operand 0, single buffered']
    #allocation5 [shape = 's32[1]{0}', space=sflag, size = 0x4, scoped, tag = 'scoped memory for pt_forward_fused.1']
    #allocation6 [shape = 'u8[512]{0}', space=vmem, size = 0x400, scoped, tag = 'output window, operand 1, single buffered']
    #allocation7 [shape = 's32[1]{0}', space=sflag, size = 0x4, scoped, tag = 'scoped memory for pt_forward_fused.1']
    #allocation8 [shape = 'u8[512]{0}', space=vmem, size = 0x400, scoped, tag = 'output window, operand 2, single buffered']
    %14 = vsyncpa [#allocation5], 0
    %15 = vsyncpa [#allocation7], 0
    // Predicated region
    $region2: #{pt_forward_fused.1} parent=1 // pred_check
      _
    $region3: #{pt_forward_fused.1} parent=1 // pred_check_branch
      %17 = sbr.rel (0) target = $region5
    $region4: #{pt_forward_fused.1} parent=1 // pred_region
      _
    $region5: #{pt_forward_fused.1} parent=1 // pred_fallthru
      _
    // Predicated region
    $region6: #{pt_forward_fused.1} parent=1 // pred_check
      _
    $region7: #{pt_forward_fused.1} parent=1 // pred_check_branch
      %19 = sbr.rel (0) target = $region9
    $region8: #{pt_forward_fused.1} parent=1 // pred_region
      _
    $region9: #{pt_forward_fused.1} parent=1 // pred_fallthru
      _
    // Predicated region
    $region10: #{pt_forward_fused.1} parent=1 // pred_check
      _
    $region11: #{pt_forward_fused.1} parent=1 // pred_check_branch
      %21 = sbr.rel (0) target = $region13
    $region12: #{pt_forward_fused.1} parent=1 // pred_region
      _
    $region13: #{pt_forward_fused.1} parent=1 // pred_fallthru
      _
    // Predicated region
    $region14: #{pt_forward_fused.1} parent=1 // pred_check
      _
    $region15: #{pt_forward_fused.1} parent=1 // pred_check_branch
      %23 = sbr.rel (0) target = $region17
    $region16: #{pt_forward_fused.1} parent=1 // pred_region
      _
    $region17: #{pt_forward_fused.1} parent=1 // pred_fallthru
      _
    // Predicated region
    $region18: #{pt_forward_fused.1} parent=1 // pred_check
      _
    $region19: #{pt_forward_fused.1} parent=1 // pred_check_branch
      %25 = sbr.rel (0) target = $region21
    $region20: #{pt_forward_fused.1} parent=1 // pred_region
      _
    $region21: #{pt_forward_fused.1} parent=1 // pred_fallthru
      _
    // Predicated region
    $region22: #{pt_forward_fused.1} parent=1 // pred_check
      _
    $region23: #{pt_forward_fused.1} parent=1 // pred_check_branch
      %27 = sbr.rel (0) target = $region25
    $region24: #{pt_forward_fused.1} parent=1 // pred_region
      _
    $region25: #{pt_forward_fused.1} parent=1 // pred_fallthru
      _
    %p29 = scmp.eq.s32.totalorder 0, 0
    // Predicated region
    $region26: #{pt_forward_fused.1} parent=1 // pred_check
      %p30 = pneg %p29
    $region27: #{pt_forward_fused.1} parent=1 // pred_check_branch
      %32 = sbr.rel (%p30) target = $region29
    $region28: #{pt_forward_fused.1} parent=1 // pred_region
      %33 = vst [vmem:[#allocation2] sm:$0xff] 0.0
      %vm34 = vcmask 64512
      %35 = vst.msk [vmem:[#allocation3] sm:$0xff] %vm34, 0.0
    $region29: #{pt_forward_fused.1} parent=1 // pred_fallthru
      _
    %v36 = vld [vmem:[%s0] sm:$0xff]
    %v37 = vld [vmem:[%s0 + $0x8] sm:$0xff]
    %v38 = vld [vmem:[%s0 + $0x10] sm:$0xff]
    %v39 = vld [vmem:[%s0 + $0x18] sm:$0xff]
    %v40 = vld [vmem:[%s0 + $0x20] sm:$0xff]
    %v41 = vld [vmem:[%s0 + $0x28] sm:$0xff]
    %v42 = vld [vmem:[%s0 + $0x30] sm:$0xff]
    %v43 = vld [vmem:[%s0 + $0x38] sm:$0xff]
    %v44 = vpack.c.bf16 %v36, %v36
    %v45 = vpack.c.bf16 %v37, %v37
    %v46 = vpack.c.bf16 %v38, %v38
    %v47 = vpack.c.bf16 %v39, %v39
    %v48 = vpack.c.bf16 %v40, %v40
    %v49 = vpack.c.bf16 %v41, %v41
    %v50 = vpack.c.bf16 %v42, %v42
    %v51 = vpack.c.bf16 %v43, %v43
    %v52 = vld [vmem:[%s1] sm:$0xff]
    %v53 = vld [vmem:[%s1 + $0x8] sm:$0xff]
    %v54 = vld [vmem:[%s1 + $0x10] sm:$0xff]
    %v55 = vld [vmem:[%s1 + $0x18] sm:$0xff]
    %v56 = vld [vmem:[%s1 + $0x20] sm:$0xff]
    %v57 = vld [vmem:[%s1 + $0x28] sm:$0xff]
    %v58 = vld [vmem:[%s1 + $0x30] sm:$0xff]
    %v59 = vld [vmem:[%s1 + $0x38] sm:$0xff]
    %v60 = vld [vmem:[%s1 + $0x40] sm:$0xff]
    %v61 = vld [vmem:[%s1 + $0x48] sm:$0xff]
    %v62 = vld [vmem:[%s1 + $0x50] sm:$0xff]
    %v63 = vld [vmem:[%s1 + $0x58] sm:$0xff]
    %v64 = vld [vmem:[%s1 + $0x60] sm:$0xff]
    %v65 = vld [vmem:[%s1 + $0x68] sm:$0xff]
    %v66 = vld [vmem:[%s1 + $0x70] sm:$0xff]
    %v67 = vld [vmem:[%s1 + $0x78] sm:$0xff]
    %v68 = vld [vmem:[%s1 + $0x80] sm:$0xff]
    %v69 = vld [vmem:[%s1 + $0x88] sm:$0xff]
    %v70 = vld [vmem:[%s1 + $0x90] sm:$0xff]
    %v71 = vld [vmem:[%s1 + $0x98] sm:$0xff]
    %v72 = vld [vmem:[%s1 + $0xa0] sm:$0xff]
    %v73 = vld [vmem:[%s1 + $0xa8] sm:$0xff]
    %v74 = vld [vmem:[%s1 + $0xb0] sm:$0xff]
    %v75 = vld [vmem:[%s1 + $0xb8] sm:$0xff]
    %v76 = vld [vmem:[%s1 + $0xc0] sm:$0xff]
    %v77 = vld [vmem:[%s1 + $0xc8] sm:$0xff]
    %v78 = vld [vmem:[%s1 + $0xd0] sm:$0xff]
    %v79 = vld [vmem:[%s1 + $0xd8] sm:$0xff]
    %v80 = vld [vmem:[%s1 + $0xe0] sm:$0xff]
    %v81 = vld [vmem:[%s1 + $0xe8] sm:$0xff]
    %v82 = vld [vmem:[%s1 + $0xf0] sm:$0xff]
    %v83 = vld [vmem:[%s1 + $0xf8] sm:$0xff]
    %v84 = vld [vmem:[%s1 + $0x100] sm:$0xff]
    %v85 = vld [vmem:[%s1 + $0x108] sm:$0xff]
    %v86 = vld [vmem:[%s1 + $0x110] sm:$0xff]
    %v87 = vld [vmem:[%s1 + $0x118] sm:$0xff]
    %v88 = vld [vmem:[%s1 + $0x120] sm:$0xff]
    %v89 = vld [vmem:[%s1 + $0x128] sm:$0xff]
    %v90 = vld [vmem:[%s1 + $0x130] sm:$0xff]
    %v91 = vld [vmem:[%s1 + $0x138] sm:$0xff]
    %v92 = vld [vmem:[%s1 + $0x140] sm:$0xff]
    %v93 = vld [vmem:[%s1 + $0x148] sm:$0xff]
    %v94 = vld [vmem:[%s1 + $0x150] sm:$0xff]
    %v95 = vld [vmem:[%s1 + $0x158] sm:$0xff]
    %v96 = vld [vmem:[%s1 + $0x160] sm:$0xff]
    %v97 = vld [vmem:[%s1 + $0x168] sm:$0xff]
    %v98 = vld [vmem:[%s1 + $0x170] sm:$0xff]
    %v99 = vld [vmem:[%s1 + $0x178] sm:$0xff]
    %v100 = vld [vmem:[%s1 + $0x180] sm:$0xff]
    %v101 = vld [vmem:[%s1 + $0x188] sm:$0xff]
    %v102 = vld [vmem:[%s1 + $0x190] sm:$0xff]
    %v103 = vld [vmem:[%s1 + $0x198] sm:$0xff]
    %v104 = vld [vmem:[%s1 + $0x1a0] sm:$0xff]
    %v105 = vld [vmem:[%s1 + $0x1a8] sm:$0xff]
    %v106 = vld [vmem:[%s1 + $0x1b0] sm:$0xff]
    %v107 = vld [vmem:[%s1 + $0x1b8] sm:$0xff]
    %v108 = vld [vmem:[%s1 + $0x1c0] sm:$0xff]
    %v109 = vld [vmem:[%s1 + $0x1c8] sm:$0xff]
    %v110 = vld [vmem:[%s1 + $0x1d0] sm:$0xff]
    %v111 = vld [vmem:[%s1 + $0x1d8] sm:$0xff]
    %v112 = vld [vmem:[%s1 + $0x1e0] sm:$0xff]
    %v113 = vld [vmem:[%s1 + $0x1e8] sm:$0xff]
    %v114 = vld [vmem:[%s1 + $0x1f0] sm:$0xff]
    %v115 = vld [vmem:[%s1 + $0x1f8] sm:$0xff]
    %v116 = vld [vmem:[%s1 + $0x200] sm:$0xff]
    %v117 = vld [vmem:[%s1 + $0x208] sm:$0xff]
    %v118 = vld [vmem:[%s1 + $0x210] sm:$0xff]
    %v119 = vld [vmem:[%s1 + $0x218] sm:$0xff]
    %v120 = vld [vmem:[%s1 + $0x220] sm:$0xff]
    %v121 = vld [vmem:[%s1 + $0x228] sm:$0xff]
    %v122 = vld [vmem:[%s1 + $0x230] sm:$0xff]
    %v123 = vld [vmem:[%s1 + $0x238] sm:$0xff]
    %v124 = vld [vmem:[%s1 + $0x240] sm:$0xff]
    %v125 = vld [vmem:[%s1 + $0x248] sm:$0xff]
    %v126 = vld [vmem:[%s1 + $0x250] sm:$0xff]
    %v127 = vld [vmem:[%s1 + $0x258] sm:$0xff]
    %v128 = vld [vmem:[%s1 + $0x260] sm:$0xff]
    %v129 = vld [vmem:[%s1 + $0x268] sm:$0xff]
    %v130 = vld [vmem:[%s1 + $0x270] sm:$0xff]
    %v131 = vld [vmem:[%s1 + $0x278] sm:$0xff]
    %v132 = vld [vmem:[%s1 + $0x280] sm:$0xff]
    %v133 = vld [vmem:[%s1 + $0x288] sm:$0xff]
    %v134 = vld [vmem:[%s1 + $0x290] sm:$0xff]
    %v135 = vld [vmem:[%s1 + $0x298] sm:$0xff]
    %v136 = vld [vmem:[%s1 + $0x2a0] sm:$0xff]
    %v137 = vld [vmem:[%s1 + $0x2a8] sm:$0xff]
    %v138 = vld [vmem:[%s1 + $0x2b0] sm:$0xff]
    %v139 = vld [vmem:[%s1 + $0x2b8] sm:$0xff]
    %v140 = vld [vmem:[%s1 + $0x2c0] sm:$0xff]
    %v141 = vld [vmem:[%s1 + $0x2c8] sm:$0xff]
    %v142 = vld [vmem:[%s1 + $0x2d0] sm:$0xff]
    %v143 = vld [vmem:[%s1 + $0x2d8] sm:$0xff]
    %v144 = vld [vmem:[%s1 + $0x2e0] sm:$0xff]
    %v145 = vld [vmem:[%s1 + $0x2e8] sm:$0xff]
    %v146 = vld [vmem:[%s1 + $0x2f0] sm:$0xff]
    %v147 = vld [vmem:[%s1 + $0x2f8] sm:$0xff]
    %v148 = vld [vmem:[%s1 + $0x300] sm:$0xff]
    %v149 = vld [vmem:[%s1 + $0x308] sm:$0xff]
    %v150 = vld [vmem:[%s1 + $0x310] sm:$0xff]
    %v151 = vld [vmem:[%s1 + $0x318] sm:$0xff]
    %v152 = vld [vmem:[%s1 + $0x320] sm:$0xff]
    %v153 = vld [vmem:[%s1 + $0x328] sm:$0xff]
    %v154 = vld [vmem:[%s1 + $0x330] sm:$0xff]
    %v155 = vld [vmem:[%s1 + $0x338] sm:$0xff]
    %v156 = vld [vmem:[%s1 + $0x340] sm:$0xff]
    %v157 = vld [vmem:[%s1 + $0x348] sm:$0xff]
    %v158 = vld [vmem:[%s1 + $0x350] sm:$0xff]
    %v159 = vld [vmem:[%s1 + $0x358] sm:$0xff]
    %v160 = vld [vmem:[%s1 + $0x360] sm:$0xff]
    %v161 = vld [vmem:[%s1 + $0x368] sm:$0xff]
    %v162 = vld [vmem:[%s1 + $0x370] sm:$0xff]
    %v163 = vld [vmem:[%s1 + $0x378] sm:$0xff]
    %v164 = vld [vmem:[%s1 + $0x380] sm:$0xff]
    %v165 = vld [vmem:[%s1 + $0x388] sm:$0xff]
    %v166 = vld [vmem:[%s1 + $0x390] sm:$0xff]
    %v167 = vld [vmem:[%s1 + $0x398] sm:$0xff]
    %v168 = vld [vmem:[%s1 + $0x3a0] sm:$0xff]
    %v169 = vld [vmem:[%s1 + $0x3a8] sm:$0xff]
    %v170 = vld [vmem:[%s1 + $0x3b0] sm:$0xff]
    %v171 = vld [vmem:[%s1 + $0x3b8] sm:$0xff]
    %v172 = vld [vmem:[%s1 + $0x3c0] sm:$0xff]
    %v173 = vld [vmem:[%s1 + $0x3c8] sm:$0xff]
    %v174 = vld [vmem:[%s1 + $0x3d0] sm:$0xff]
    %v175 = vld [vmem:[%s1 + $0x3d8] sm:$0xff]
    %v176 = vld [vmem:[%s1 + $0x3e0] sm:$0xff]
    %v177 = vld [vmem:[%s1 + $0x3e8] sm:$0xff]
    %v178 = vld [vmem:[%s1 + $0x3f0] sm:$0xff]
    %v179 = vld [vmem:[%s1 + $0x3f8] sm:$0xff]
    %v180 = vpack.c.bf16 %v53, %v52
    %v181 = vpack.c.bf16 %v55, %v54
    %v182 = vpack.c.bf16 %v57, %v56
    %v183 = vpack.c.bf16 %v59, %v58
    %v184 = vpack.c.bf16 %v61, %v60
    %v185 = vpack.c.bf16 %v63, %v62
    %v186 = vpack.c.bf16 %v65, %v64
    %v187 = vpack.c.bf16 %v67, %v66
    %v188 = vpack.c.bf16 %v69, %v68
    %v189 = vpack.c.bf16 %v71, %v70
    %v190 = vpack.c.bf16 %v73, %v72
    %v191 = vpack.c.bf16 %v75, %v74
    %v192 = vpack.c.bf16 %v77, %v76
    %v193 = vpack.c.bf16 %v79, %v78
    %v194 = vpack.c.bf16 %v81, %v80
    %v195 = vpack.c.bf16 %v83, %v82
    %v196 = vpack.c.bf16 %v85, %v84
    %v197 = vpack.c.bf16 %v87, %v86
    %v198 = vpack.c.bf16 %v89, %v88
    %v199 = vpack.c.bf16 %v91, %v90
    %v200 = vpack.c.bf16 %v93, %v92
    %v201 = vpack.c.bf16 %v95, %v94
    %v202 = vpack.c.bf16 %v97, %v96
    %v203 = vpack.c.bf16 %v99, %v98
    %v204 = vpack.c.bf16 %v101, %v100
    %v205 = vpack.c.bf16 %v103, %v102
    %v206 = vpack.c.bf16 %v105, %v104
    %v207 = vpack.c.bf16 %v107, %v106
    %v208 = vpack.c.bf16 %v109, %v108
    %v209 = vpack.c.bf16 %v111, %v110
    %v210 = vpack.c.bf16 %v113, %v112
    %v211 = vpack.c.bf16 %v115, %v114
    %v212 = vpack.c.bf16 %v117, %v116
    %v213 = vpack.c.bf16 %v119, %v118
    %v214 = vpack.c.bf16 %v121, %v120
    %v215 = vpack.c.bf16 %v123, %v122
    %v216 = vpack.c.bf16 %v125, %v124
    %v217 = vpack.c.bf16 %v127, %v126
    %v218 = vpack.c.bf16 %v129, %v128
    %v219 = vpack.c.bf16 %v131, %v130
    %v220 = vpack.c.bf16 %v133, %v132
    %v221 = vpack.c.bf16 %v135, %v134
    %v222 = vpack.c.bf16 %v137, %v136
    %v223 = vpack.c.bf16 %v139, %v138
    %v224 = vpack.c.bf16 %v141, %v140
    %v225 = vpack.c.bf16 %v143, %v142
    %v226 = vpack.c.bf16 %v145, %v144
    %v227 = vpack.c.bf16 %v147, %v146
    %v228 = vpack.c.bf16 %v149, %v148
    %v229 = vpack.c.bf16 %v151, %v150
    %v230 = vpack.c.bf16 %v153, %v152
    %v231 = vpack.c.bf16 %v155, %v154
    %v232 = vpack.c.bf16 %v157, %v156
    %v233 = vpack.c.bf16 %v159, %v158
    %v234 = vpack.c.bf16 %v161, %v160
    %v235 = vpack.c.bf16 %v163, %v162
    %v236 = vpack.c.bf16 %v165, %v164
    %v237 = vpack.c.bf16 %v167, %v166
    %v238 = vpack.c.bf16 %v169, %v168
    %v239 = vpack.c.bf16 %v171, %v170
    %v240 = vpack.c.bf16 %v173, %v172
    %v241 = vpack.c.bf16 %v175, %v174
    %v242 = vpack.c.bf16 %v177, %v176
    %v243 = vpack.c.bf16 %v179, %v178
    %244 = vmatprep.subr.bf16.mxu0 0
    %245 = vmatpush1.bf16.msra.mxu0 %v180
    %246 = vmatprep.subr.bf16.mxu0 0
    %247 = vmatpush1.bf16.msra.mxu0 %v181
    %248 = vmatprep.subr.bf16.mxu0 0
    %249 = vmatpush1.bf16.msra.mxu0 %v182
    %250 = vmatprep.subr.bf16.mxu0 0
    %251 = vmatpush1.bf16.msra.mxu0 %v183
    %252 = vmatprep.subr.bf16.mxu0 0
    %253 = vmatpush1.bf16.msra.mxu0 %v184
    %254 = vmatprep.subr.bf16.mxu0 0
    %255 = vmatpush1.bf16.msra.mxu0 %v185
    %256 = vmatprep.subr.bf16.mxu0 0
    %257 = vmatpush1.bf16.msra.mxu0 %v186
    %258 = vmatprep.subr.bf16.mxu0 0
    %259 = vmatpush1.bf16.msra.mxu0 %v187
    %260 = vmatprep.subr.bf16.mxu0 0
    %261 = vmatpush1.bf16.msra.mxu0 %v188
    %262 = vmatprep.subr.bf16.mxu0 0
    %263 = vmatpush1.bf16.msra.mxu0 %v189
    %264 = vmatprep.subr.bf16.mxu0 0
    %265 = vmatpush1.bf16.msra.mxu0 %v190
    %266 = vmatprep.subr.bf16.mxu0 0
    %267 = vmatpush1.bf16.msra.mxu0 %v191
    %268 = vmatprep.subr.bf16.mxu0 0
    %269 = vmatpush1.bf16.msra.mxu0 %v192
    %270 = vmatprep.subr.bf16.mxu0 0
    %271 = vmatpush1.bf16.msra.mxu0 %v193
    %272 = vmatprep.subr.bf16.mxu0 0
    %273 = vmatpush1.bf16.msra.mxu0 %v194
    %274 = vmatprep.subr.bf16.mxu0 0
    %275 = vmatpush1.bf16.msra.mxu0 %v195
    %276 = vmatprep.mubr.bf16.mxu0 %v45
    %277 = vmatmul.mubr.bf16.gmra.mrb[0].mxu0 %v44
    %v278 = vpop.f32.mrb[0].mxu0
    %v279 = vadd.f32 0.0, %v278
    %v280 = vpop.f32.mrb[0].mxu0
    %v281 = vpop.f32.mrb[0].mxu0
    %v282 = vpop.f32.mrb[0].mxu0
    %283 = vdwg.mxu0
    %284 = vmatprep.subr.bf16.mxu0 0
    %285 = vmatpush1.bf16.msra.mxu0 %v196
    %286 = vmatprep.subr.bf16.mxu0 0
    %287 = vmatpush1.bf16.msra.mxu0 %v197
    %288 = vmatprep.subr.bf16.mxu0 0
    %289 = vmatpush1.bf16.msra.mxu0 %v198
    %290 = vmatprep.subr.bf16.mxu0 0
    %291 = vmatpush1.bf16.msra.mxu0 %v199
    %292 = vmatprep.subr.bf16.mxu0 0
    %293 = vmatpush1.bf16.msra.mxu0 %v200
    %294 = vmatprep.subr.bf16.mxu0 0
    %295 = vmatpush1.bf16.msra.mxu0 %v201
    %296 = vmatprep.subr.bf16.mxu0 0
    %297 = vmatpush1.bf16.msra.mxu0 %v202
    %298 = vmatprep.subr.bf16.mxu0 0
    %299 = vmatpush1.bf16.msra.mxu0 %v203
    %300 = vmatprep.subr.bf16.mxu0 0
    %301 = vmatpush1.bf16.msra.mxu0 %v204
    %302 = vmatprep.subr.bf16.mxu0 0
    %303 = vmatpush1.bf16.msra.mxu0 %v205
    %304 = vmatprep.subr.bf16.mxu0 0
    %305 = vmatpush1.bf16.msra.mxu0 %v206
    %306 = vmatprep.subr.bf16.mxu0 0
    %307 = vmatpush1.bf16.msra.mxu0 %v207
    %308 = vmatprep.subr.bf16.mxu0 0
    %309 = vmatpush1.bf16.msra.mxu0 %v208
    %310 = vmatprep.subr.bf16.mxu0 0
    %311 = vmatpush1.bf16.msra.mxu0 %v209
    %312 = vmatprep.subr.bf16.mxu0 0
    %313 = vmatpush1.bf16.msra.mxu0 %v210
    %314 = vmatprep.subr.bf16.mxu0 0
    %315 = vmatpush1.bf16.msra.mxu0 %v211
    %316 = vmatprep.mubr.bf16.mxu0 %v47
    %317 = vmatmul.mubr.bf16.gmra.mrb[0].mxu0 %v46
    %v318 = vpop.f32.mrb[0].mxu0
    %v319 = vadd.f32 %v279, %v318
    %v320 = vpop.f32.mrb[0].mxu0
    %v321 = vpop.f32.mrb[0].mxu0
    %v322 = vpop.f32.mrb[0].mxu0
    %323 = vdwg.mxu0
    %324 = vmatprep.subr.bf16.mxu0 0
    %325 = vmatpush1.bf16.msra.mxu0 %v212
    %326 = vmatprep.subr.bf16.mxu0 0
    %327 = vmatpush1.bf16.msra.mxu0 %v213
    %328 = vmatprep.subr.bf16.mxu0 0
    %329 = vmatpush1.bf16.msra.mxu0 %v214
    %330 = vmatprep.subr.bf16.mxu0 0
    %331 = vmatpush1.bf16.msra.mxu0 %v215
    %332 = vmatprep.subr.bf16.mxu0 0
    %333 = vmatpush1.bf16.msra.mxu0 %v216
    %334 = vmatprep.subr.bf16.mxu0 0
    %335 = vmatpush1.bf16.msra.mxu0 %v217
    %336 = vmatprep.subr.bf16.mxu0 0
    %337 = vmatpush1.bf16.msra.mxu0 %v218
    %338 = vmatprep.subr.bf16.mxu0 0
    %339 = vmatpush1.bf16.msra.mxu0 %v219
    %340 = vmatprep.subr.bf16.mxu0 0
    %341 = vmatpush1.bf16.msra.mxu0 %v220
    %342 = vmatprep.subr.bf16.mxu0 0
    %343 = vmatpush1.bf16.msra.mxu0 %v221
    %344 = vmatprep.subr.bf16.mxu0 0
    %345 = vmatpush1.bf16.msra.mxu0 %v222
    %346 = vmatprep.subr.bf16.mxu0 0
    %347 = vmatpush1.bf16.msra.mxu0 %v223
    %348 = vmatprep.subr.bf16.mxu0 0
    %349 = vmatpush1.bf16.msra.mxu0 %v224
    %350 = vmatprep.subr.bf16.mxu0 0
    %351 = vmatpush1.bf16.msra.mxu0 %v225
    %352 = vmatprep.subr.bf16.mxu0 0
    %353 = vmatpush1.bf16.msra.mxu0 %v226
    %354 = vmatprep.subr.bf16.mxu0 0
    %355 = vmatpush1.bf16.msra.mxu0 %v227
    %356 = vmatprep.mubr.bf16.mxu0 %v49
    %357 = vmatmul.mubr.bf16.gmra.mrb[0].mxu0 %v48
    %v358 = vpop.f32.mrb[0].mxu0
    %v359 = vadd.f32 %v319, %v358
    %v360 = vpop.f32.mrb[0].mxu0
    %v361 = vpop.f32.mrb[0].mxu0
    %v362 = vpop.f32.mrb[0].mxu0
    %363 = vdwg.mxu0
    %364 = vmatprep.subr.bf16.mxu0 0
    %365 = vmatpush1.bf16.msra.mxu0 %v228
    %366 = vmatprep.subr.bf16.mxu0 0
    %367 = vmatpush1.bf16.msra.mxu0 %v229
    %368 = vmatprep.subr.bf16.mxu0 0
    %369 = vmatpush1.bf16.msra.mxu0 %v230
    %370 = vmatprep.subr.bf16.mxu0 0
    %371 = vmatpush1.bf16.msra.mxu0 %v231
    %372 = vmatprep.subr.bf16.mxu0 0
    %373 = vmatpush1.bf16.msra.mxu0 %v232
    %374 = vmatprep.subr.bf16.mxu0 0
    %375 = vmatpush1.bf16.msra.mxu0 %v233
    %376 = vmatprep.subr.bf16.mxu0 0
    %377 = vmatpush1.bf16.msra.mxu0 %v234
    %378 = vmatprep.subr.bf16.mxu0 0
    %379 = vmatpush1.bf16.msra.mxu0 %v235
    %380 = vmatprep.subr.bf16.mxu0 0
    %381 = vmatpush1.bf16.msra.mxu0 %v236
    %382 = vmatprep.subr.bf16.mxu0 0
    %383 = vmatpush1.bf16.msra.mxu0 %v237
    %384 = vmatprep.subr.bf16.mxu0 0
    %385 = vmatpush1.bf16.msra.mxu0 %v238
    %386 = vmatprep.subr.bf16.mxu0 0
    %387 = vmatpush1.bf16.msra.mxu0 %v239
    %388 = vmatprep.subr.bf16.mxu0 0
    %389 = vmatpush1.bf16.msra.mxu0 %v240
    %390 = vmatprep.subr.bf16.mxu0 0
    %391 = vmatpush1.bf16.msra.mxu0 %v241
    %392 = vmatprep.subr.bf16.mxu0 0
    %393 = vmatpush1.bf16.msra.mxu0 %v242
    %394 = vmatprep.subr.bf16.mxu0 0
    %395 = vmatpush1.bf16.msra.mxu0 %v243
    %396 = vmatprep.mubr.bf16.mxu0 %v51
    %397 = vmatmul.mubr.bf16.gmra.mrb[0].mxu0 %v50
    %v398 = vpop.f32.mrb[0].mxu0
    %v399 = vadd.f32 %v359, %v398
    %v400 = vpop.f32.mrb[0].mxu0
    %v401 = vpop.f32.mrb[0].mxu0
    %v402 = vpop.f32.mrb[0].mxu0
    %403 = vdwg.mxu0
    %v404 = vld [vmem:[#allocation2] sm:$0xff]
    %v405 = vadd.f32 %v404, %v399
    %vm406 = vcmask 80896
    %407 = vst.msk [vmem:[#allocation2] sm:$0xff] %vm406, %v405
    %v408 = vld [vmem:[#allocation3] sm:$0xff]
    %409 = vmatprep.subr.bf16.mxu0 %v45
    %410 = vmatpush1.bf16.xpose.msra.mxu0 %v44
    %411 = vmatprep.subr.bf16.mxu0 0
    %412 = vmatpush1.bf16.xpose.msra.mxu0 0
    %413 = vmatprep.subr.bf16.mxu0 0
    %414 = vmatpush1.bf16.xpose.msra.mxu0 0
    %415 = vmatprep.subr.bf16.mxu0 0
    %416 = vmatpush1.bf16.xpose.msra.mxu0 0
    %417 = vmatprep.subr.bf16.mxu0 0
    %418 = vmatpush1.bf16.xpose.msra.mxu0 0
    %419 = vmatprep.subr.bf16.mxu0 0
    %420 = vmatpush1.bf16.xpose.msra.mxu0 0
    %421 = vmatprep.subr.bf16.mxu0 0
    %422 = vmatpush1.bf16.xpose.msra.mxu0 0
    %423 = vmatprep.subr.bf16.mxu0 0
    %424 = vmatpush1.bf16.xpose.msra.mxu0 0
    %425 = vmatprep.subr.bf16.mxu0 0
    %426 = vmatpush1.bf16.xpose.msra.mxu0 0
    %427 = vmatprep.subr.bf16.mxu0 0
    %428 = vmatpush1.bf16.xpose.msra.mxu0 0
    %429 = vmatprep.subr.bf16.mxu0 0
    %430 = vmatpush1.bf16.xpose.msra.mxu0 0
    %431 = vmatprep.subr.bf16.mxu0 0
    %432 = vmatpush1.bf16.xpose.msra.mxu0 0
    %433 = vmatprep.subr.bf16.mxu0 0
    %434 = vmatpush1.bf16.xpose.msra.mxu0 0
    %435 = vmatprep.subr.bf16.mxu0 0
    %436 = vmatpush1.bf16.xpose.msra.mxu0 0
    %437 = vmatprep.subr.bf16.mxu0 0
    %438 = vmatpush1.bf16.xpose.msra.mxu0 0
    %439 = vmatprep.subr.bf16.mxu0 0
    %440 = vmatpush1.bf16.xpose.msra.mxu0 0
    %441 = vmatprep.mubr.bf16.mxu0 %v45
    %442 = vmatmul.mubr.bf16.gmra.mrb[0].mxu0 %v44
    %v443 = vpop.f32.mrb[0].mxu0
    %v444 = vadd.f32 0.0, %v443
    %v445 = vpop.f32.mrb[0].mxu0
    %v446 = vpop.f32.mrb[0].mxu0
    %v447 = vpop.f32.mrb[0].mxu0
    %448 = vdwg.mxu0
    %449 = vmatprep.subr.bf16.mxu0 %v47
    %450 = vmatpush1.bf16.xpose.msra.mxu0 %v46
    %451 = vmatprep.subr.bf16.mxu0 0
    %452 = vmatpush1.bf16.xpose.msra.mxu0 0
    %453 = vmatprep.subr.bf16.mxu0 0
    %454 = vmatpush1.bf16.xpose.msra.mxu0 0
    %455 = vmatprep.subr.bf16.mxu0 0
    %456 = vmatpush1.bf16.xpose.msra.mxu0 0
    %457 = vmatprep.subr.bf16.mxu0 0
    %458 = vmatpush1.bf16.xpose.msra.mxu0 0
    %459 = vmatprep.subr.bf16.mxu0 0
    %460 = vmatpush1.bf16.xpose.msra.mxu0 0
    %461 = vmatprep.subr.bf16.mxu0 0
    %462 = vmatpush1.bf16.xpose.msra.mxu0 0
    %463 = vmatprep.subr.bf16.mxu0 0
    %464 = vmatpush1.bf16.xpose.msra.mxu0 0
    %465 = vmatprep.subr.bf16.mxu0 0
    %466 = vmatpush1.bf16.xpose.msra.mxu0 0
    %467 = vmatprep.subr.bf16.mxu0 0
    %468 = vmatpush1.bf16.xpose.msra.mxu0 0
    %469 = vmatprep.subr.bf16.mxu0 0
    %470 = vmatpush1.bf16.xpose.msra.mxu0 0
    %471 = vmatprep.subr.bf16.mxu0 0
    %472 = vmatpush1.bf16.xpose.msra.mxu0 0
    %473 = vmatprep.subr.bf16.mxu0 0
    %474 = vmatpush1.bf16.xpose.msra.mxu0 0
    %475 = vmatprep.subr.bf16.mxu0 0
    %476 = vmatpush1.bf16.xpose.msra.mxu0 0
    %477 = vmatprep.subr.bf16.mxu0 0
    %478 = vmatpush1.bf16.xpose.msra.mxu0 0
    %479 = vmatprep.subr.bf16.mxu0 0
    %480 = vmatpush1.bf16.xpose.msra.mxu0 0
    %481 = vmatprep.mubr.bf16.mxu0 %v47
    %482 = vmatmul.mubr.bf16.gmra.mrb[0].mxu0 %v46
    %v483 = vpop.f32.mrb[0].mxu0
    %v484 = vadd.f32 %v444, %v483
    %v485 = vpop.f32.mrb[0].mxu0
    %v486 = vpop.f32.mrb[0].mxu0
    %v487 = vpop.f32.mrb[0].mxu0
    %488 = vdwg.mxu0
    %489 = vmatprep.subr.bf16.mxu0 %v49
    %490 = vmatpush1.bf16.xpose.msra.mxu0 %v48
    %491 = vmatprep.subr.bf16.mxu0 0
    %492 = vmatpush1.bf16.xpose.msra.mxu0 0
    %493 = vmatprep.subr.bf16.mxu0 0
    %494 = vmatpush1.bf16.xpose.msra.mxu0 0
    %495 = vmatprep.subr.bf16.mxu0 0
    %496 = vmatpush1.bf16.xpose.msra.mxu0 0
    %497 = vmatprep.subr.bf16.mxu0 0
    %498 = vmatpush1.bf16.xpose.msra.mxu0 0
    %499 = vmatprep.subr.bf16.mxu0 0
    %500 = vmatpush1.bf16.xpose.msra.mxu0 0
    %501 = vmatprep.subr.bf16.mxu0 0
    %502 = vmatpush1.bf16.xpose.msra.mxu0 0
    %503 = vmatprep.subr.bf16.mxu0 0
    %504 = vmatpush1.bf16.xpose.msra.mxu0 0
    %505 = vmatprep.subr.bf16.mxu0 0
    %506 = vmatpush1.bf16.xpose.msra.mxu0 0
    %507 = vmatprep.subr.bf16.mxu0 0
    %508 = vmatpush1.bf16.xpose.msra.mxu0 0
    %509 = vmatprep.subr.bf16.mxu0 0
    %510 = vmatpush1.bf16.xpose.msra.mxu0 0
    %511 = vmatprep.subr.bf16.mxu0 0
    %512 = vmatpush1.bf16.xpose.msra.mxu0 0
    %513 = vmatprep.subr.bf16.mxu0 0
    %514 = vmatpush1.bf16.xpose.msra.mxu0 0
    %515 = vmatprep.subr.bf16.mxu0 0
    %516 = vmatpush1.bf16.xpose.msra.mxu0 0
    %517 = vmatprep.subr.bf16.mxu0 0
    %518 = vmatpush1.bf16.xpose.msra.mxu0 0
    %519 = vmatprep.subr.bf16.mxu0 0
    %520 = vmatpush1.bf16.xpose.msra.mxu0 0
    %521 = vmatprep.mubr.bf16.mxu0 %v49
    %522 = vmatmul.mubr.bf16.gmra.mrb[0].mxu0 %v48
    %v523 = vpop.f32.mrb[0].mxu0
    %v524 = vadd.f32 %v484, %v523
    %v525 = vpop.f32.mrb[0].mxu0
    %v526 = vpop.f32.mrb[0].mxu0
    %v527 = vpop.f32.mrb[0].mxu0
    %528 = vdwg.mxu0
    %529 = vmatprep.subr.bf16.mxu0 %v51
    %530 = vmatpush1.bf16.xpose.msra.mxu0 %v50
    %531 = vmatprep.subr.bf16.mxu0 0
    %532 = vmatpush1.bf16.xpose.msra.mxu0 0
    %533 = vmatprep.subr.bf16.mxu0 0
    %534 = vmatpush1.bf16.xpose.msra.mxu0 0
    %535 = vmatprep.subr.bf16.mxu0 0
    %536 = vmatpush1.bf16.xpose.msra.mxu0 0
    %537 = vmatprep.subr.bf16.mxu0 0
    %538 = vmatpush1.bf16.xpose.msra.mxu0 0
    %539 = vmatprep.subr.bf16.mxu0 0
    %540 = vmatpush1.bf16.xpose.msra.mxu0 0
    %541 = vmatprep.subr.bf16.mxu0 0
    %542 = vmatpush1.bf16.xpose.msra.mxu0 0
    %543 = vmatprep.subr.bf16.mxu0 0
    %544 = vmatpush1.bf16.xpose.msra.mxu0 0
    %545 = vmatprep.subr.bf16.mxu0 0
    %546 = vmatpush1.bf16.xpose.msra.mxu0 0
    %547 = vmatprep.subr.bf16.mxu0 0
    %548 = vmatpush1.bf16.xpose.msra.mxu0 0
    %549 = vmatprep.subr.bf16.mxu0 0
    %550 = vmatpush1.bf16.xpose.msra.mxu0 0
    %551 = vmatprep.subr.bf16.mxu0 0
    %552 = vmatpush1.bf16.xpose.msra.mxu0 0
    %553 = vmatprep.subr.bf16.mxu0 0
    %554 = vmatpush1.bf16.xpose.msra.mxu0 0
    %555 = vmatprep.subr.bf16.mxu0 0
    %556 = vmatpush1.bf16.xpose.msra.mxu0 0
    %557 = vmatprep.subr.bf16.mxu0 0
    %558 = vmatpush1.bf16.xpose.msra.mxu0 0
    %559 = vmatprep.subr.bf16.mxu0 0
    %560 = vmatpush1.bf16.xpose.msra.mxu0 0
    %561 = vmatprep.mubr.bf16.mxu0 %v51
    %562 = vmatmul.mubr.bf16.gmra.mrb[0].mxu0 %v50
    %v563 = vpop.f32.mrb[0].mxu0
    %v564 = vadd.f32 %v524, %v563
    %v565 = vpop.f32.mrb[0].mxu0
    %v566 = vpop.f32.mrb[0].mxu0
    %v567 = vpop.f32.mrb[0].mxu0
    %568 = vdwg.mxu0
    %v569 = vadd.f32 %v408, %v564
    %vm570 = vcmask 64512
    %571 = vst.msk [vmem:[#allocation3] sm:$0xff] %vm570, %v569
    // Predicated region
    $region30: #{pt_forward_fused.1} parent=1 // pred_check
      %p572 = pneg %p29
    $region31: #{pt_forward_fused.1} parent=1 // pred_check_branch
      %574 = sbr.rel (%p572) target = $region33
    $region32: #{pt_forward_fused.1} parent=1 // pred_region
      %v575 = vld [vmem:[#allocation2] sm:$0xff]
      %v576 = vld [vmem:[%s2] sm:$0x1]
      %v578 = vlaneseq
      %v579 = vshrl.u32 %v578, 7
      %v580 = vsub.s32 0, %v579
      %v581 = vrot.slane %v576, %v580
      %v583 = vadd.f32 %v575, %v581
      %v584 = vld [vmem:[#allocation3 + $0x4] sm:$0xf]
      %v585 = vlaneseq
      %v586 = vand.u32 %v585, 127
      %v587 = vld [vmem:[%s4] sm:$0xf]
      %588 = vset.pattern.permute.xlu0 0
      %589 = vperm.xlu0 %588, %v587
      %v590 = vpop.permute.xlu0 %589
      %vm591 = vcmp.eq.s32.totalorder %v586, %v590
      %v592 = vsel %vm591, 1, 0
      %v593 = vcvt.s32.f32 %v592
      %vm594 = vcmask 1043456
      %v595 = vsel %vm594, %v583, -inf
      %596 = vmax.xlane.f32.xlu0 %v595
      %v597 = vpop.xlane.xlu0 %596
      %v598 = vsub.f32 %v583, %v597
      %v599 = vmul.f32 %v598, 1.442695
      %v600 = vpow.pop %v599
      %v601 = vsel %vm594, %v600, 0.0
      %602 = vadd.xlane.f32.xlu0 %v601
      %v603 = vpop.xlane.xlu0 %602
      %v604 = vlog2.pop %v603
      %v605 = vmul.f32 %v604, 0.6931472
      %v606 = vadd.f32 %v597, %v605
      %v607 = vmul.f32 %v583, %v593
      %v608 = vsel %vm594, %v607, 0.0
      %609 = vadd.xlane.f32.xlu0 %v608
      %v610 = vpop.xlane.xlu0 %609
      %v611 = vsub.f32 %v606, %v610
      %vm612 = vcmask 3072
      %v613 = vsel %vm612, %v611, 0.0
      %614 = vadd.xlane.f32.xlu0 %v613
      %v615 = vpop.xlane.xlu0 %614
      %v616 = vrot.slane %v615, 4
      %v617 = vadd.f32 %v615, %v616
      %v618 = vrot.slane %v617, 2
      %v619 = vadd.f32 %v617, %v618
      %v620 = vrot.slane %v619, 1
      %v621 = vadd.f32 %v619, %v620
      %s622 = vtos %v621
      %v623 = vstv %s622
      %v624 = vmul.f32 %v623, 0.25
      %v625 = vsel %vm612, %v610, 0.0
      %626 = vadd.xlane.f32.xlu0 %v625
      %v627 = vpop.xlane.xlu0 %626
      %v628 = vrot.slane %v627, 4
      %v629 = vadd.f32 %v627, %v628
      %v630 = vrot.slane %v629, 2
      %v631 = vadd.f32 %v629, %v630
      %v632 = vrot.slane %v631, 1
      %v633 = vadd.f32 %v631, %v632
      %s634 = vtos %v633
      %vm635 = vcmask 1047556
      %v636 = vsel %vm635, %v583, -inf
      %637 = vmax.xlane.f32.xlu0 %v636
      %v638 = vpop.xlane.xlu0 %637
      %v639 = vsub.f32 %v583, %v638
      %v640 = vmul.f32 %v639, 1.442695
      %v641 = vpow.pop %v640
      %v642 = vsel %vm635, %v641, 0.0
      %643 = vadd.xlane.f32.xlu0 %v642
      %v644 = vpop.xlane.xlu0 %643
      %v645 = vrcp.pop %v644
      %v646 = vmul.f32 %v641, %v645
      %v647 = vlog2.pop %v644
      %v648 = vmul.f32 %v647, 0.6931472
      %v649 = vadd.f32 %v638, %v648
      %v650 = vadd.f32 %v584, 1.0
      %v651 = vmul.f32 %v650, 0.05
      %v652 = vld [vmem:[%s3] sm:$0xf]
      %653 = vset.pattern.permute.xlu0 0
      %654 = vperm.xlu0 %653, %v652
      %v655 = vpop.permute.xlu0 %654
      %vm656 = vcmp.eq.s32.totalorder %v586, %v655
      %v657 = vsel %vm656, 1, 0
      %v658 = vcvt.s32.f32 %v657
      %v660 = vrot.slane %v658, 4
      %v662 = vsub.f32 %v646, %v660
      %v664 = vrot.slane %v662, 4
      %666 = vmatprep.subr.mxu0 0.0
      %667 = vmatpush1.xpose.msra.mxu0 %v593
      %668 = vmatprep.subr.mxu0 0.0
      %669 = vmatpush1.xpose.msra.mxu0 0.0
      %670 = vmatprep.subr.mxu0 0.0
      %671 = vmatpush1.xpose.msra.mxu0 0.0
      %672 = vmatprep.subr.mxu0 0.0
      %673 = vmatpush1.xpose.msra.mxu0 0.0
      %674 = vmatprep.subr.mxu0 0.0
      %675 = vmatpush1.xpose.msra.mxu0 0.0
      %676 = vmatprep.subr.mxu0 0.0
      %677 = vmatpush1.xpose.msra.mxu0 0.0
      %678 = vmatprep.subr.mxu0 0.0
      %679 = vmatpush1.xpose.msra.mxu0 0.0
      %680 = vmatprep.subr.mxu0 0.0
      %681 = vmatpush1.xpose.msra.mxu0 0.0
      %682 = vmatprep.subr.mxu0 0.0
      %683 = vmatpush1.xpose.msra.mxu0 0.0
      %684 = vmatprep.subr.mxu0 0.0
      %685 = vmatpush1.xpose.msra.mxu0 0.0
      %686 = vmatprep.subr.mxu0 0.0
      %687 = vmatpush1.xpose.msra.mxu0 0.0
      %688 = vmatprep.subr.mxu0 0.0
      %689 = vmatpush1.xpose.msra.mxu0 0.0
      %690 = vmatprep.subr.mxu0 0.0
      %691 = vmatpush1.xpose.msra.mxu0 0.0
      %692 = vmatprep.subr.mxu0 0.0
      %693 = vmatpush1.xpose.msra.mxu0 0.0
      %694 = vmatprep.subr.mxu0 0.0
      %695 = vmatpush1.xpose.msra.mxu0 0.0
      %696 = vmatprep.subr.mxu0 0.0
      %697 = vmatpush1.xpose.msra.mxu0 0.0
      %698 = vmatprep.subr.mxu0 0.0
      %699 = vmatpush1.xpose.msra.mxu0 0.0
      %700 = vmatprep.subr.mxu0 0.0
      %701 = vmatpush1.xpose.msra.mxu0 0.0
      %702 = vmatprep.subr.mxu0 0.0
      %703 = vmatpush1.xpose.msra.mxu0 0.0
      %704 = vmatprep.subr.mxu0 0.0
      %705 = vmatpush1.xpose.msra.mxu0 0.0
      %706 = vmatprep.subr.mxu0 0.0
      %707 = vmatpush1.xpose.msra.mxu0 0.0
      %708 = vmatprep.subr.mxu0 0.0
      %709 = vmatpush1.xpose.msra.mxu0 0.0
      %710 = vmatprep.subr.mxu0 0.0
      %711 = vmatpush1.xpose.msra.mxu0 0.0
      %712 = vmatprep.subr.mxu0 0.0
      %713 = vmatpush1.xpose.msra.mxu0 0.0
      %714 = vmatprep.subr.mxu0 0.0
      %715 = vmatpush1.xpose.msra.mxu0 0.0
      %716 = vmatprep.subr.mxu0 0.0
      %717 = vmatpush1.xpose.msra.mxu0 0.0
      %718 = vmatprep.subr.mxu0 0.0
      %719 = vmatpush1.xpose.msra.mxu0 0.0
      %720 = vmatprep.subr.mxu0 0.0
      %721 = vmatpush1.xpose.msra.mxu0 0.0
      %722 = vmatprep.subr.mxu0 0.0
      %723 = vmatpush1.xpose.msra.mxu0 0.0
      %724 = vmatprep.subr.mxu0 0.0
      %725 = vmatpush1.xpose.msra.mxu0 0.0
      %726 = vmatprep.subr.mxu0 0.0
      %727 = vmatpush1.xpose.msra.mxu0 0.0
      %728 = vmatprep.subr.mxu0 0.0
      %729 = vmatpush1.xpose.msra.mxu0 0.0
      %730 = vmatprep.mubr.f32.mxu0 0.0
      %731 = vmatmul.mubr.f32.gmra.mrb[0].mxu0 %v664
      %v732 = vpop.f32.mrb[0].mxu0
      %v733 = vadd.f32 0.0, %v732
      %v734 = vpop.f32.mrb[0].mxu0
      %735 = vdwg.mxu0
      %v736 = vlaneseq
      %v737 = vshrl.u32 %v736, 7
      %v738 = vsub.s32 0, %v737
      %v739 = vrot.slane %v651, %v738
      %741 = vbcast.lane.b32.xlu0 %v739, 256
      %v742 = vpop.permute.xlu0 %741
      %v743 = vlaneseq
      %v744 = vshrl.u32 %v743, 7
      %v745 = vsub.s32 1, %v744
      %v746 = vrot.slane %v651, %v745
      %748 = vbcast.lane.b32.xlu0 %v746, 256
      %v749 = vpop.permute.xlu0 %748
      %v750 = vlaneseq
      %v751 = vshrl.u32 %v750, 7
      %v752 = vsub.s32 2, %v751
      %v753 = vrot.slane %v651, %v752
      %755 = vbcast.lane.b32.xlu0 %v753, 256
      %v756 = vpop.permute.xlu0 %755
      %v757 = vlaneseq
      %v758 = vshrl.u32 %v757, 7
      %v759 = vsub.s32 3, %v758
      %v760 = vrot.slane %v651, %v759
      %762 = vbcast.lane.b32.xlu0 %v760, 256
      %v763 = vpop.permute.xlu0 %762
      %v764 = vcombine.high %v662, %v662
      %v766 = vunpack.c.l.s4 1966171168
      %v767 = vunpack.c.0.s8 %v766
      %v768 = vlaneseq
      %v769 = vshrl.u32 %v768, 7
      %v770 = vsub.s32 %v767, %v769
      %v771 = vrot.slane %v764, %v770
      %v772 = vcombine.high %v771, %v771
      %v774 = vunpack.c.l.s4 1966171168
      %v775 = vunpack.c.0.s8 %v774
      %v776 = vlaneseq
      %v777 = vshrl.u32 %v776, 7
      %v778 = vsub.s32 %v775, %v777
      %v779 = vrot.slane %v771, %v778
      %v781 = vunpack.c.l.s4 1966171168
      %v782 = vunpack.c.0.s8 %v781
      %v783 = vlaneseq
      %v784 = vshrl.u32 %v783, 7
      %v785 = vsub.s32 %v782, %v784
      %v786 = vrot.slane %v772, %v785
      %v787 = vcombine.high %v779, %v779
      %v788 = vcombine.high %v786, %v786
      %v789 = vlaneseq
      %v790 = vshrl.u32 %v789, 7
      %v791 = vsub.s32 0, %v790
      %v792 = vrot.slane %v779, %v791
      %v793 = vlaneseq
      %v794 = vshrl.u32 %v793, 7
      %v795 = vsub.s32 0, %v794
      %v796 = vrot.slane %v786, %v795
      %v797 = vlaneseq
      %v798 = vshrl.u32 %v797, 7
      %v799 = vsub.s32 0, %v798
      %v800 = vrot.slane %v787, %v799
      %v801 = vlaneseq
      %v802 = vshrl.u32 %v801, 7
      %v803 = vsub.s32 0, %v802
      %v804 = vrot.slane %v788, %v803
      %v809 = vmul.f32 %v742, %v792
      %v810 = vmul.f32 %v749, %v796
      %v811 = vmul.f32 %v756, %v800
      %v812 = vmul.f32 %v763, %v804
      %v813 = vsub.f32 %v583, %v809
      %v814 = vsub.f32 %v583, %v810
      %v815 = vsub.f32 %v583, %v811
      %v816 = vsub.f32 %v583, %v812
      %v817 = vsel %vm594, %v813, -inf
      %818 = vmax.xlane.f32.xlu0 %v817
      %v819 = vpop.xlane.xlu0 %818
      %v820 = vsel %vm594, %v814, -inf
      %821 = vmax.xlane.f32.xlu0 %v820
      %v822 = vpop.xlane.xlu0 %821
      %v823 = vsel %vm594, %v815, -inf
      %824 = vmax.xlane.f32.xlu0 %v823
      %v825 = vpop.xlane.xlu0 %824
      %v826 = vsel %vm594, %v816, -inf
      %827 = vmax.xlane.f32.xlu0 %v826
      %v828 = vpop.xlane.xlu0 %827
      %v829 = vsub.f32 %v813, %v819
      %v830 = vsub.f32 %v814, %v822
      %v831 = vsub.f32 %v815, %v825
      %v832 = vsub.f32 %v816, %v828
      %v833 = vmul.f32 %v829, 1.442695
      %v834 = vpow.pop %v833
      %v835 = vmul.f32 %v830, 1.442695
      %v836 = vpow.pop %v835
      %v837 = vmul.f32 %v831, 1.442695
      %v838 = vpow.pop %v837
      %v839 = vmul.f32 %v832, 1.442695
      %v840 = vpow.pop %v839
      %v841 = vsel %vm594, %v834, 0.0
      %842 = vadd.xlane.f32.xlu0 %v841
      %v843 = vpop.xlane.xlu0 %842
      %v844 = vsel %vm594, %v836, 0.0
      %845 = vadd.xlane.f32.xlu0 %v844
      %v846 = vpop.xlane.xlu0 %845
      %v847 = vsel %vm594, %v838, 0.0
      %848 = vadd.xlane.f32.xlu0 %v847
      %v849 = vpop.xlane.xlu0 %848
      %v850 = vsel %vm594, %v840, 0.0
      %851 = vadd.xlane.f32.xlu0 %v850
      %v852 = vpop.xlane.xlu0 %851
      %v853 = vlog2.pop %v843
      %v854 = vmul.f32 %v853, 0.6931472
      %v855 = vlog2.pop %v846
      %v856 = vmul.f32 %v855, 0.6931472
      %v857 = vlog2.pop %v849
      %v858 = vmul.f32 %v857, 0.6931472
      %v859 = vlog2.pop %v852
      %v860 = vmul.f32 %v859, 0.6931472
      %v861 = vadd.f32 %v819, %v854
      %v862 = vadd.f32 %v822, %v856
      %v863 = vadd.f32 %v825, %v858
      %v864 = vadd.f32 %v828, %v860
      %v865 = vsel %vm594, %v861, 0.0
      %v866 = vrot.slane %v865, 4
      %v867 = vadd.f32 %v865, %v866
      %v868 = vrot.slane %v867, 2
      %v869 = vadd.f32 %v867, %v868
      %v870 = vrot.slane %v869, 1
      %v871 = vadd.f32 %v869, %v870
      %v872 = vsel %vm594, %v862, 0.0
      %v873 = vrot.slane %v872, 4
      %v874 = vadd.f32 %v872, %v873
      %v875 = vrot.slane %v874, 2
      %v876 = vadd.f32 %v874, %v875
      %v877 = vrot.slane %v876, 1
      %v878 = vadd.f32 %v876, %v877
      %v879 = vsel %vm594, %v863, 0.0
      %v880 = vrot.slane %v879, 4
      %v881 = vadd.f32 %v879, %v880
      %v882 = vrot.slane %v881, 2
      %v883 = vadd.f32 %v881, %v882
      %v884 = vrot.slane %v883, 1
      %v885 = vadd.f32 %v883, %v884
      %v886 = vsel %vm594, %v864, 0.0
      %v887 = vrot.slane %v886, 4
      %v888 = vadd.f32 %v886, %v887
      %v889 = vrot.slane %v888, 2
      %v890 = vadd.f32 %v888, %v889
      %v891 = vrot.slane %v890, 1
      %v892 = vadd.f32 %v890, %v891
      %v893 = vmul.f32 %v651, %v733
      %vm894 = vcmask 27648
      %v895 = vsel %vm894, %v893, 0.0
      %896 = vadd.xlane.f32.xlu0 %v895
      %v897 = vpop.xlane.xlu0 %896
      %v898 = vstv %s634
      %v899 = vsub.f32 %v871, %v898
      %v900 = vsub.f32 %v878, %v898
      %v901 = vsub.f32 %v885, %v898
      %v902 = vsub.f32 %v892, %v898
      %v904 = vrot.slane %v897, 1
      %v905 = vrot.slane %v897, 2
      %v906 = vrot.slane %v897, 3
      %v911 = vadd.f32 %v899, %v897
      %v912 = vadd.f32 %v900, %v904
      %v913 = vadd.f32 %v901, %v905
      %v914 = vadd.f32 %v902, %v906
      %v915 = vmul.f32 %v911, 0.25
      %v916 = vmul.f32 %v912, 0.25
      %v917 = vmul.f32 %v913, 0.25
      %v918 = vmul.f32 %v914, 0.25
      %v919 = vsub.f32 %v915, %v624
      %v920 = vsub.f32 %v916, %v624
      %v921 = vsub.f32 %v917, %v624
      %v922 = vsub.f32 %v918, %v624
      %923 = vset.pattern.permute.xlu0 1
      %924 = vperm.xlu0 %923, %v652
      %v925 = vpop.permute.xlu0 %924
      %vm926 = vcmp.eq.s32.totalorder %v586, %v925
      %v927 = vsel %vm926, 1, 0
      %v928 = vcvt.s32.f32 %v927
      %v930 = vrot.slane %v928, 4
      %v932 = vsub.f32 %v646, %v930
      %v934 = vrot.slane %v932, 4
      %936 = vmatprep.subr.mxu0 0.0
      %937 = vmatpush1.xpose.msra.mxu0 %v593
      %938 = vmatprep.subr.mxu0 0.0
      %939 = vmatpush1.xpose.msra.mxu0 0.0
      %940 = vmatprep.subr.mxu0 0.0
      %941 = vmatpush1.xpose.msra.mxu0 0.0
      %942 = vmatprep.subr.mxu0 0.0
      %943 = vmatpush1.xpose.msra.mxu0 0.0
      %944 = vmatprep.subr.mxu0 0.0
      %945 = vmatpush1.xpose.msra.mxu0 0.0
      %946 = vmatprep.subr.mxu0 0.0
      %947 = vmatpush1.xpose.msra.mxu0 0.0
      %948 = vmatprep.subr.mxu0 0.0
      %949 = vmatpush1.xpose.msra.mxu0 0.0
      %950 = vmatprep.subr.mxu0 0.0
      %951 = vmatpush1.xpose.msra.mxu0 0.0
      %952 = vmatprep.subr.mxu0 0.0
      %953 = vmatpush1.xpose.msra.mxu0 0.0
      %954 = vmatprep.subr.mxu0 0.0
      %955 = vmatpush1.xpose.msra.mxu0 0.0
      %956 = vmatprep.subr.mxu0 0.0
      %957 = vmatpush1.xpose.msra.mxu0 0.0
      %958 = vmatprep.subr.mxu0 0.0
      %959 = vmatpush1.xpose.msra.mxu0 0.0
      %960 = vmatprep.subr.mxu0 0.0
      %961 = vmatpush1.xpose.msra.mxu0 0.0
      %962 = vmatprep.subr.mxu0 0.0
      %963 = vmatpush1.xpose.msra.mxu0 0.0
      %964 = vmatprep.subr.mxu0 0.0
      %965 = vmatpush1.xpose.msra.mxu0 0.0
      %966 = vmatprep.subr.mxu0 0.0
      %967 = vmatpush1.xpose.msra.mxu0 0.0
      %968 = vmatprep.subr.mxu0 0.0
      %969 = vmatpush1.xpose.msra.mxu0 0.0
      %970 = vmatprep.subr.mxu0 0.0
      %971 = vmatpush1.xpose.msra.mxu0 0.0
      %972 = vmatprep.subr.mxu0 0.0
      %973 = vmatpush1.xpose.msra.mxu0 0.0
      %974 = vmatprep.subr.mxu0 0.0
      %975 = vmatpush1.xpose.msra.mxu0 0.0
      %976 = vmatprep.subr.mxu0 0.0
      %977 = vmatpush1.xpose.msra.mxu0 0.0
      %978 = vmatprep.subr.mxu0 0.0
      %979 = vmatpush1.xpose.msra.mxu0 0.0
      %980 = vmatprep.subr.mxu0 0.0
      %981 = vmatpush1.xpose.msra.mxu0 0.0
      %982 = vmatprep.subr.mxu0 0.0
      %983 = vmatpush1.xpose.msra.mxu0 0.0
      %984 = vmatprep.subr.mxu0 0.0
      %985 = vmatpush1.xpose.msra.mxu0 0.0
      %986 = vmatprep.subr.mxu0 0.0
      %987 = vmatpush1.xpose.msra.mxu0 0.0
      %988 = vmatprep.subr.mxu0 0.0
      %989 = vmatpush1.xpose.msra.mxu0 0.0
      %990 = vmatprep.subr.mxu0 0.0
      %991 = vmatpush1.xpose.msra.mxu0 0.0
      %992 = vmatprep.subr.mxu0 0.0
      %993 = vmatpush1.xpose.msra.mxu0 0.0
      %994 = vmatprep.subr.mxu0 0.0
      %995 = vmatpush1.xpose.msra.mxu0 0.0
      %996 = vmatprep.subr.mxu0 0.0
      %997 = vmatpush1.xpose.msra.mxu0 0.0
      %998 = vmatprep.subr.mxu0 0.0
      %999 = vmatpush1.xpose.msra.mxu0 0.0
      %1000 = vmatprep.mubr.f32.mxu0 0.0
      %1001 = vmatmul.mubr.f32.gmra.mrb[0].mxu0 %v934
      %v1002 = vpop.f32.mrb[0].mxu0
      %v1003 = vadd.f32 0.0, %v1002
      %v1004 = vpop.f32.mrb[0].mxu0
      %1005 = vdwg.mxu0
      %v1006 = vcombine.high %v932, %v932
      %v1008 = vunpack.c.l.s4 1966171168
      %v1009 = vunpack.c.0.s8 %v1008
      %v1010 = vlaneseq
      %v1011 = vshrl.u32 %v1010, 7
      %v1012 = vsub.s32 %v1009, %v1011
      %v1013 = vrot.slane %v1006, %v1012
      %v1014 = vcombine.high %v1013, %v1013
      %v1016 = vunpack.c.l.s4 1966171168
      %v1017 = vunpack.c.0.s8 %v1016
      %v1018 = vlaneseq
      %v1019 = vshrl.u32 %v1018, 7
      %v1020 = vsub.s32 %v1017, %v1019
      %v1021 = vrot.slane %v1013, %v1020
      %v1023 = vunpack.c.l.s4 1966171168
      %v1024 = vunpack.c.0.s8 %v1023
      %v1025 = vlaneseq
      %v1026 = vshrl.u32 %v1025, 7
      %v1027 = vsub.s32 %v1024, %v1026
      %v1028 = vrot.slane %v1014, %v1027
      %v1029 = vcombine.high %v1021, %v1021
      %v1030 = vcombine.high %v1028, %v1028
      %v1031 = vlaneseq
      %v1032 = vshrl.u32 %v1031, 7
      %v1033 = vsub.s32 0, %v1032
      %v1034 = vrot.slane %v1021, %v1033
      %v1035 = vlaneseq
      %v1036 = vshrl.u32 %v1035, 7
      %v1037 = vsub.s32 0, %v1036
      %v1038 = vrot.slane %v1028, %v1037
      %v1039 = vlaneseq
      %v1040 = vshrl.u32 %v1039, 7
      %v1041 = vsub.s32 0, %v1040
      %v1042 = vrot.slane %v1029, %v1041
      %v1043 = vlaneseq
      %v1044 = vshrl.u32 %v1043, 7
      %v1045 = vsub.s32 0, %v1044
      %v1046 = vrot.slane %v1030, %v1045
      %v1051 = vmul.f32 %v742, %v1034
      %v1052 = vmul.f32 %v749, %v1038
      %v1053 = vmul.f32 %v756, %v1042
      %v1054 = vmul.f32 %v763, %v1046
      %v1055 = vsub.f32 %v583, %v1051
      %v1056 = vsub.f32 %v583, %v1052
      %v1057 = vsub.f32 %v583, %v1053
      %v1058 = vsub.f32 %v583, %v1054
      %v1059 = vsel %vm594, %v1055, -inf
      %1060 = vmax.xlane.f32.xlu0 %v1059
      %v1061 = vpop.xlane.xlu0 %1060
      %v1062 = vsel %vm594, %v1056, -inf
      %1063 = vmax.xlane.f32.xlu0 %v1062
      %v1064 = vpop.xlane.xlu0 %1063
      %v1065 = vsel %vm594, %v1057, -inf
      %1066 = vmax.xlane.f32.xlu0 %v1065
      %v1067 = vpop.xlane.xlu0 %1066
      %v1068 = vsel %vm594, %v1058, -inf
      %1069 = vmax.xlane.f32.xlu0 %v1068
      %v1070 = vpop.xlane.xlu0 %1069
      %v1071 = vsub.f32 %v1055, %v1061
      %v1072 = vsub.f32 %v1056, %v1064
      %v1073 = vsub.f32 %v1057, %v1067
      %v1074 = vsub.f32 %v1058, %v1070
      %v1075 = vmul.f32 %v1071, 1.442695
      %v1076 = vpow.pop %v1075
      %v1077 = vmul.f32 %v1072, 1.442695
      %v1078 = vpow.pop %v1077
      %v1079 = vmul.f32 %v1073, 1.442695
      %v1080 = vpow.pop %v1079
      %v1081 = vmul.f32 %v1074, 1.442695
      %v1082 = vpow.pop %v1081
      %v1083 = vsel %vm594, %v1076, 0.0
      %1084 = vadd.xlane.f32.xlu0 %v1083
      %v1085 = vpop.xlane.xlu0 %1084
      %v1086 = vsel %vm594, %v1078, 0.0
      %1087 = vadd.xlane.f32.xlu0 %v1086
      %v1088 = vpop.xlane.xlu0 %1087
      %v1089 = vsel %vm594, %v1080, 0.0
      %1090 = vadd.xlane.f32.xlu0 %v1089
      %v1091 = vpop.xlane.xlu0 %1090
      %v1092 = vsel %vm594, %v1082, 0.0
      %1093 = vadd.xlane.f32.xlu0 %v1092
      %v1094 = vpop.xlane.xlu0 %1093
      %v1095 = vlog2.pop %v1085
      %v1096 = vmul.f32 %v1095, 0.6931472
      %v1097 = vlog2.pop %v1088
      %v1098 = vmul.f32 %v1097, 0.6931472
      %v1099 = vlog2.pop %v1091
      %v1100 = vmul.f32 %v1099, 0.6931472
      %v1101 = vlog2.pop %v1094
      %v1102 = vmul.f32 %v1101, 0.6931472
      %v1103 = vadd.f32 %v1061, %v1096
      %v1104 = vadd.f32 %v1064, %v1098
      %v1105 = vadd.f32 %v1067, %v1100
      %v1106 = vadd.f32 %v1070, %v1102
      %v1107 = vsel %vm594, %v1103, 0.0
      %v1108 = vrot.slane %v1107, 4
      %v1109 = vadd.f32 %v1107, %v1108
      %v1110 = vrot.slane %v1109, 2
      %v1111 = vadd.f32 %v1109, %v1110
      %v1112 = vrot.slane %v1111, 1
      %v1113 = vadd.f32 %v1111, %v1112
      %v1114 = vsel %vm594, %v1104, 0.0
      %v1115 = vrot.slane %v1114, 4
      %v1116 = vadd.f32 %v1114, %v1115
      %v1117 = vrot.slane %v1116, 2
      %v1118 = vadd.f32 %v1116, %v1117
      %v1119 = vrot.slane %v1118, 1
      %v1120 = vadd.f32 %v1118, %v1119
      %v1121 = vsel %vm594, %v1105, 0.0
      %v1122 = vrot.slane %v1121, 4
      %v1123 = vadd.f32 %v1121, %v1122
      %v1124 = vrot.slane %v1123, 2
      %v1125 = vadd.f32 %v1123, %v1124
      %v1126 = vrot.slane %v1125, 1
      %v1127 = vadd.f32 %v1125, %v1126
      %v1128 = vsel %vm594, %v1106, 0.0
      %v1129 = vrot.slane %v1128, 4
      %v1130 = vadd.f32 %v1128, %v1129
      %v1131 = vrot.slane %v1130, 2
      %v1132 = vadd.f32 %v1130, %v1131
      %v1133 = vrot.slane %v1132, 1
      %v1134 = vadd.f32 %v1132, %v1133
      %v1135 = vmul.f32 %v651, %v1003
      %v1136 = vsel %vm894, %v1135, 0.0
      %1137 = vadd.xlane.f32.xlu0 %v1136
      %v1138 = vpop.xlane.xlu0 %1137
      %v1139 = vsub.f32 %v1113, %v898
      %v1140 = vsub.f32 %v1120, %v898
      %v1141 = vsub.f32 %v1127, %v898
      %v1142 = vsub.f32 %v1134, %v898
      %v1144 = vrot.slane %v1138, 1
      %v1145 = vrot.slane %v1138, 2
      %v1146 = vrot.slane %v1138, 3
      %v1151 = vadd.f32 %v1139, %v1138
      %v1152 = vadd.f32 %v1140, %v1144
      %v1153 = vadd.f32 %v1141, %v1145
      %v1154 = vadd.f32 %v1142, %v1146
      %v1155 = vmul.f32 %v1151, 0.25
      %v1156 = vmul.f32 %v1152, 0.25
      %v1157 = vmul.f32 %v1153, 0.25
      %v1158 = vmul.f32 %v1154, 0.25
      %v1159 = vsub.f32 %v1155, %v624
      %v1160 = vsub.f32 %v1156, %v624
      %v1161 = vsub.f32 %v1157, %v624
      %v1162 = vsub.f32 %v1158, %v624
      %vm1163 = vcmp.lt.f32.partialorder %v1159, %v919
      %vm1164 = vcmp.lt.f32.partialorder %v1160, %v920
      %vm1165 = vcmp.lt.f32.partialorder %v1161, %v921
      %vm1166 = vcmp.lt.f32.partialorder %v1162, %v922
      %v1167 = vsel %vm1163, %v1159, %v919
      %v1168 = vsel %vm1164, %v1160, %v920
      %v1169 = vsel %vm1165, %v1161, %v921
      %v1170 = vsel %vm1166, %v1162, %v922
      %v1171 = vrot.slane %v652, 1
      %v1172 = vrot.slane %v652, 2
      %v1173 = vrot.slane %v652, 3
      %1174 = vrot.lane.b32.xlu0 %v652, 127
      %v1175 = vpop.permute.xlu0 %1174
      %1176 = vrot.lane.b32.xlu0 %v1171, 127
      %v1177 = vpop.permute.xlu0 %1176
      %1178 = vrot.lane.b32.xlu0 %v1172, 127
      %v1179 = vpop.permute.xlu0 %1178
      %1180 = vrot.lane.b32.xlu0 %v1173, 127
      %v1181 = vpop.permute.xlu0 %1180
      %v1182 = vsel %vm1163, %v1175, %v652
      %v1183 = vsel %vm1164, %v1177, %v1171
      %v1184 = vsel %vm1165, %v1179, %v1172
      %v1185 = vsel %vm1166, %v1181, %v1173
      %1186 = vset.pattern.permute.xlu0 2
      %1187 = vperm.xlu0 %1186, %v652
      %v1188 = vpop.permute.xlu0 %1187
      %vm1189 = vcmp.eq.s32.totalorder %v586, %v1188
      %v1190 = vsel %vm1189, 1, 0
      %v1191 = vcvt.s32.f32 %v1190
      %v1193 = vrot.slane %v1191, 4
      %v1195 = vsub.f32 %v646, %v1193
      %v1197 = vrot.slane %v1195, 4
      %1199 = vmatprep.subr.mxu0 0.0
      %1200 = vmatpush1.xpose.msra.mxu0 %v593
      %1201 = vmatprep.subr.mxu0 0.0
      %1202 = vmatpush1.xpose.msra.mxu0 0.0
      %1203 = vmatprep.subr.mxu0 0.0
      %1204 = vmatpush1.xpose.msra.mxu0 0.0
      %1205 = vmatprep.subr.mxu0 0.0
      %1206 = vmatpush1.xpose.msra.mxu0 0.0
      %1207 = vmatprep.subr.mxu0 0.0
      %1208 = vmatpush1.xpose.msra.mxu0 0.0
      %1209 = vmatprep.subr.mxu0 0.0
      %1210 = vmatpush1.xpose.msra.mxu0 0.0
      %1211 = vmatprep.subr.mxu0 0.0
      %1212 = vmatpush1.xpose.msra.mxu0 0.0
      %1213 = vmatprep.subr.mxu0 0.0
      %1214 = vmatpush1.xpose.msra.mxu0 0.0
      %1215 = vmatprep.subr.mxu0 0.0
      %1216 = vmatpush1.xpose.msra.mxu0 0.0
      %1217 = vmatprep.subr.mxu0 0.0
      %1218 = vmatpush1.xpose.msra.mxu0 0.0
      %1219 = vmatprep.subr.mxu0 0.0
      %1220 = vmatpush1.xpose.msra.mxu0 0.0
      %1221 = vmatprep.subr.mxu0 0.0
      %1222 = vmatpush1.xpose.msra.mxu0 0.0
      %1223 = vmatprep.subr.mxu0 0.0
      %1224 = vmatpush1.xpose.msra.mxu0 0.0
      %1225 = vmatprep.subr.mxu0 0.0
      %1226 = vmatpush1.xpose.msra.mxu0 0.0
      %1227 = vmatprep.subr.mxu0 0.0
      %1228 = vmatpush1.xpose.msra.mxu0 0.0
      %1229 = vmatprep.subr.mxu0 0.0
      %1230 = vmatpush1.xpose.msra.mxu0 0.0
      %1231 = vmatprep.subr.mxu0 0.0
      %1232 = vmatpush1.xpose.msra.mxu0 0.0
      %1233 = vmatprep.subr.mxu0 0.0
      %1234 = vmatpush1.xpose.msra.mxu0 0.0
      %1235 = vmatprep.subr.mxu0 0.0
      %1236 = vmatpush1.xpose.msra.mxu0 0.0
      %1237 = vmatprep.subr.mxu0 0.0
      %1238 = vmatpush1.xpose.msra.mxu0 0.0
      %1239 = vmatprep.subr.mxu0 0.0
      %1240 = vmatpush1.xpose.msra.mxu0 0.0
      %1241 = vmatprep.subr.mxu0 0.0
      %1242 = vmatpush1.xpose.msra.mxu0 0.0
      %1243 = vmatprep.subr.mxu0 0.0
      %1244 = vmatpush1.xpose.msra.mxu0 0.0
      %1245 = vmatprep.subr.mxu0 0.0
      %1246 = vmatpush1.xpose.msra.mxu0 0.0
      %1247 = vmatprep.subr.mxu0 0.0
      %1248 = vmatpush1.xpose.msra.mxu0 0.0
      %1249 = vmatprep.subr.mxu0 0.0
      %1250 = vmatpush1.xpose.msra.mxu0 0.0
      %1251 = vmatprep.subr.mxu0 0.0
      %1252 = vmatpush1.xpose.msra.mxu0 0.0
      %1253 = vmatprep.subr.mxu0 0.0
      %1254 = vmatpush1.xpose.msra.mxu0 0.0
      %1255 = vmatprep.subr.mxu0 0.0
      %1256 = vmatpush1.xpose.msra.mxu0 0.0
      %1257 = vmatprep.subr.mxu0 0.0
      %1258 = vmatpush1.xpose.msra.mxu0 0.0
      %1259 = vmatprep.subr.mxu0 0.0
      %1260 = vmatpush1.xpose.msra.mxu0 0.0
      %1261 = vmatprep.subr.mxu0 0.0
      %1262 = vmatpush1.xpose.msra.mxu0 0.0
      %1263 = vmatprep.mubr.f32.mxu0 0.0
      %1264 = vmatmul.mubr.f32.gmra.mrb[0].mxu0 %v1197
      %v1265 = vpop.f32.mrb[0].mxu0
      %v1266 = vadd.f32 0.0, %v1265
      %v1267 = vpop.f32.mrb[0].mxu0
      %1268 = vdwg.mxu0
      %v1269 = vcombine.high %v1195, %v1195
      %v1271 = vunpack.c.l.s4 1966171168
      %v1272 = vunpack.c.0.s8 %v1271
      %v1273 = vlaneseq
      %v1274 = vshrl.u32 %v1273, 7
      %v1275 = vsub.s32 %v1272, %v1274
      %v1276 = vrot.slane %v1269, %v1275
      %v1277 = vcombine.high %v1276, %v1276
      %v1279 = vunpack.c.l.s4 1966171168
      %v1280 = vunpack.c.0.s8 %v1279
      %v1281 = vlaneseq
      %v1282 = vshrl.u32 %v1281, 7
      %v1283 = vsub.s32 %v1280, %v1282
      %v1284 = vrot.slane %v1276, %v1283
      %v1286 = vunpack.c.l.s4 1966171168
      %v1287 = vunpack.c.0.s8 %v1286
      %v1288 = vlaneseq
      %v1289 = vshrl.u32 %v1288, 7
      %v1290 = vsub.s32 %v1287, %v1289
      %v1291 = vrot.slane %v1277, %v1290
      %v1292 = vcombine.high %v1284, %v1284
      %v1293 = vcombine.high %v1291, %v1291
      %v1294 = vlaneseq
      %v1295 = vshrl.u32 %v1294, 7
      %v1296 = vsub.s32 0, %v1295
      %v1297 = vrot.slane %v1284, %v1296
      %v1298 = vlaneseq
      %v1299 = vshrl.u32 %v1298, 7
      %v1300 = vsub.s32 0, %v1299
      %v1301 = vrot.slane %v1291, %v1300
      %v1302 = vlaneseq
      %v1303 = vshrl.u32 %v1302, 7
      %v1304 = vsub.s32 0, %v1303
      %v1305 = vrot.slane %v1292, %v1304
      %v1306 = vlaneseq
      %v1307 = vshrl.u32 %v1306, 7
      %v1308 = vsub.s32 0, %v1307
      %v1309 = vrot.slane %v1293, %v1308
      %v1314 = vmul.f32 %v742, %v1297
      %v1315 = vmul.f32 %v749, %v1301
      %v1316 = vmul.f32 %v756, %v1305
      %v1317 = vmul.f32 %v763, %v1309
      %v1318 = vsub.f32 %v583, %v1314
      %v1319 = vsub.f32 %v583, %v1315
      %v1320 = vsub.f32 %v583, %v1316
      %v1321 = vsub.f32 %v583, %v1317
      %v1322 = vsel %vm594, %v1318, -inf
      %1323 = vmax.xlane.f32.xlu0 %v1322
      %v1324 = vpop.xlane.xlu0 %1323
      %v1325 = vsel %vm594, %v1319, -inf
      %1326 = vmax.xlane.f32.xlu0 %v1325
      %v1327 = vpop.xlane.xlu0 %1326
      %v1328 = vsel %vm594, %v1320, -inf
      %1329 = vmax.xlane.f32.xlu0 %v1328
      %v1330 = vpop.xlane.xlu0 %1329
      %v1331 = vsel %vm594, %v1321, -inf
      %1332 = vmax.xlane.f32.xlu0 %v1331
      %v1333 = vpop.xlane.xlu0 %1332
      %v1334 = vsub.f32 %v1318, %v1324
      %v1335 = vsub.f32 %v1319, %v1327
      %v1336 = vsub.f32 %v1320, %v1330
      %v1337 = vsub.f32 %v1321, %v1333
      %v1338 = vmul.f32 %v1334, 1.442695
      %v1339 = vpow.pop %v1338
      %v1340 = vmul.f32 %v1335, 1.442695
      %v1341 = vpow.pop %v1340
      %v1342 = vmul.f32 %v1336, 1.442695
      %v1343 = vpow.pop %v1342
      %v1344 = vmul.f32 %v1337, 1.442695
      %v1345 = vpow.pop %v1344
      %v1346 = vsel %vm594, %v1339, 0.0
      %1347 = vadd.xlane.f32.xlu0 %v1346
      %v1348 = vpop.xlane.xlu0 %1347
      %v1349 = vsel %vm594, %v1341, 0.0
      %1350 = vadd.xlane.f32.xlu0 %v1349
      %v1351 = vpop.xlane.xlu0 %1350
      %v1352 = vsel %vm594, %v1343, 0.0
      %1353 = vadd.xlane.f32.xlu0 %v1352
      %v1354 = vpop.xlane.xlu0 %1353
      %v1355 = vsel %vm594, %v1345, 0.0
      %1356 = vadd.xlane.f32.xlu0 %v1355
      %v1357 = vpop.xlane.xlu0 %1356
      %v1358 = vlog2.pop %v1348
      %v1359 = vmul.f32 %v1358, 0.6931472
      %v1360 = vlog2.pop %v1351
      %v1361 = vmul.f32 %v1360, 0.6931472
      %v1362 = vlog2.pop %v1354
      %v1363 = vmul.f32 %v1362, 0.6931472
      %v1364 = vlog2.pop %v1357
      %v1365 = vmul.f32 %v1364, 0.6931472
      %v1366 = vadd.f32 %v1324, %v1359
      %v1367 = vadd.f32 %v1327, %v1361
      %v1368 = vadd.f32 %v1330, %v1363
      %v1369 = vadd.f32 %v1333, %v1365
      %v1370 = vsel %vm594, %v1366, 0.0
      %v1371 = vrot.slane %v1370, 4
      %v1372 = vadd.f32 %v1370, %v1371
      %v1373 = vrot.slane %v1372, 2
      %v1374 = vadd.f32 %v1372, %v1373
      %v1375 = vrot.slane %v1374, 1
      %v1376 = vadd.f32 %v1374, %v1375
      %v1377 = vsel %vm594, %v1367, 0.0
      %v1378 = vrot.slane %v1377, 4
      %v1379 = vadd.f32 %v1377, %v1378
      %v1380 = vrot.slane %v1379, 2
      %v1381 = vadd.f32 %v1379, %v1380
      %v1382 = vrot.slane %v1381, 1
      %v1383 = vadd.f32 %v1381, %v1382
      %v1384 = vsel %vm594, %v1368, 0.0
      %v1385 = vrot.slane %v1384, 4
      %v1386 = vadd.f32 %v1384, %v1385
      %v1387 = vrot.slane %v1386, 2
      %v1388 = vadd.f32 %v1386, %v1387
      %v1389 = vrot.slane %v1388, 1
      %v1390 = vadd.f32 %v1388, %v1389
      %v1391 = vsel %vm594, %v1369, 0.0
      %v1392 = vrot.slane %v1391, 4
      %v1393 = vadd.f32 %v1391, %v1392
      %v1394 = vrot.slane %v1393, 2
      %v1395 = vadd.f32 %v1393, %v1394
      %v1396 = vrot.slane %v1395, 1
      %v1397 = vadd.f32 %v1395, %v1396
      %v1398 = vmul.f32 %v651, %v1266
      %v1399 = vsel %vm894, %v1398, 0.0
      %1400 = vadd.xlane.f32.xlu0 %v1399
      %v1401 = vpop.xlane.xlu0 %1400
      %v1402 = vsub.f32 %v1376, %v898
      %v1403 = vsub.f32 %v1383, %v898
      %v1404 = vsub.f32 %v1390, %v898
      %v1405 = vsub.f32 %v1397, %v898
      %v1407 = vrot.slane %v1401, 1
      %v1408 = vrot.slane %v1401, 2
      %v1409 = vrot.slane %v1401, 3
      %v1414 = vadd.f32 %v1402, %v1401
      %v1415 = vadd.f32 %v1403, %v1407
      %v1416 = vadd.f32 %v1404, %v1408
      %v1417 = vadd.f32 %v1405, %v1409
      %v1418 = vmul.f32 %v1414, 0.25
      %v1419 = vmul.f32 %v1415, 0.25
      %v1420 = vmul.f32 %v1416, 0.25
      %v1421 = vmul.f32 %v1417, 0.25
      %v1422 = vsub.f32 %v1418, %v624
      %v1423 = vsub.f32 %v1419, %v624
      %v1424 = vsub.f32 %v1420, %v624
      %v1425 = vsub.f32 %v1421, %v624
      %vm1426 = vcmp.lt.f32.partialorder %v1422, %v1167
      %vm1427 = vcmp.lt.f32.partialorder %v1423, %v1168
      %vm1428 = vcmp.lt.f32.partialorder %v1424, %v1169
      %vm1429 = vcmp.lt.f32.partialorder %v1425, %v1170
      %v1430 = vsel %vm1426, %v1422, %v1167
      %v1431 = vsel %vm1427, %v1423, %v1168
      %v1432 = vsel %vm1428, %v1424, %v1169
      %v1433 = vsel %vm1429, %v1425, %v1170
      %1434 = vrot.lane.b32.xlu0 %v652, 126
      %v1435 = vpop.permute.xlu0 %1434
      %1436 = vrot.lane.b32.xlu0 %v1171, 126
      %v1437 = vpop.permute.xlu0 %1436
      %1438 = vrot.lane.b32.xlu0 %v1172, 126
      %v1439 = vpop.permute.xlu0 %1438
      %1440 = vrot.lane.b32.xlu0 %v1173, 126
      %v1441 = vpop.permute.xlu0 %1440
      %v1442 = vsel %vm1426, %v1435, %v1182
      %v1443 = vsel %vm1427, %v1437, %v1183
      %v1444 = vsel %vm1428, %v1439, %v1184
      %v1445 = vsel %vm1429, %v1441, %v1185
      %vm1446 = vcmp.lt.f32.partialorder %v1430, 0.0
      %vm1447 = vcmp.lt.f32.partialorder %v1431, 0.0
      %vm1448 = vcmp.lt.f32.partialorder %v1432, 0.0
      %vm1449 = vcmp.lt.f32.partialorder %v1433, 0.0
      %v1450 = vsel %vm1446, 1, 0
      %v1451 = vsel %vm1447, 1, 0
      %v1452 = vsel %vm1448, 1, 0
      %v1453 = vsel %vm1449, 1, 0
      %v1454 = vcvt.s32.f32 %v1450
      %v1455 = vcvt.s32.f32 %v1451
      %v1456 = vcvt.s32.f32 %v1452
      %v1457 = vcvt.s32.f32 %v1453
      %v1458 = vld [vmem:[%s5] sm:$0xf]
      %v1459 = vrot.slane %v1458, 1
      %v1460 = vrot.slane %v1458, 2
      %v1461 = vrot.slane %v1458, 3
      %vm1462 = vcmp.eq.s32.totalorder %v1442, %v1458
      %vm1463 = vcmp.eq.s32.totalorder %v1443, %v1459
      %vm1464 = vcmp.eq.s32.totalorder %v1444, %v1460
      %vm1465 = vcmp.eq.s32.totalorder %v1445, %v1461
      %vm1466 = vmand %vm1446, %vm1462
      %vm1467 = vmand %vm1447, %vm1463
      %vm1468 = vmand %vm1448, %vm1464
      %vm1469 = vmand %vm1449, %vm1465
      %v1470 = vsel %vm1466, 1, 0
      %v1471 = vsel %vm1467, 1, 0
      %v1472 = vsel %vm1468, 1, 0
      %v1473 = vsel %vm1469, 1, 0
      %v1474 = vcvt.s32.f32 %v1470
      %v1475 = vcvt.s32.f32 %v1471
      %v1476 = vcvt.s32.f32 %v1472
      %v1477 = vcvt.s32.f32 %v1473
      %1478 = vset.pattern.permute.xlu0 0
      %1479 = vperm.xlu0 %1478, %v1442
      %v1480 = vpop.permute.xlu0 %1479
      %1481 = vset.pattern.permute.xlu0 0
      %1482 = vperm.xlu0 %1481, %v1443
      %v1483 = vpop.permute.xlu0 %1482
      %1484 = vset.pattern.permute.xlu0 0
      %1485 = vperm.xlu0 %1484, %v1444
      %v1486 = vpop.permute.xlu0 %1485
      %1487 = vset.pattern.permute.xlu0 0
      %1488 = vperm.xlu0 %1487, %v1445
      %v1489 = vpop.permute.xlu0 %1488
      %v1490 = vrot.slane %v1483, 7
      %vm1491 = vcmask 1041409
      %v1492 = vsel %vm1491, %v1490, %v1480
      %v1493 = vrot.slane %v1486, 6
      %vm1494 = vcmask 1042434
      %v1495 = vsel %vm1494, %v1493, %v1492
      %v1496 = vrot.slane %v1489, 5
      %vm1497 = vcmask 1043459
      %v1498 = vsel %vm1497, %v1496, %v1495
      %vm1499 = vcmp.eq.s32.totalorder %v586, %v1498
      %v1500 = vsel %vm1499, 1, 0
      %v1501 = vcvt.s32.f32 %v1500
      %v1503 = vrot.slane %v1501, 4
      %v1505 = vmul.f32 %v583, %v1503
      %v1506 = vsel %vm635, %v1505, 0.0
      %1507 = vadd.xlane.f32.xlu0 %v1506
      %v1508 = vpop.xlane.xlu0 %1507
      %v1509 = vsub.f32 %v649, %v1508
      %v1514 = vrot.slane %v1454, 4
      %v1515 = vrot.slane %v1455, 3
      %vm1516 = vcmask 1045509
      %v1517 = vsel %vm1516, %v1515, %v1514
      %v1518 = vrot.slane %v1456, 2
      %vm1519 = vcmask 1046534
      %v1520 = vsel %vm1519, %v1518, %v1517
      %v1521 = vrot.slane %v1457, 1
      %vm1522 = vcmask 1047559
      %v1523 = vsel %vm1522, %v1521, %v1520
      %v1525 = vmul.f32 %v1509, %v1523
      %v1527 = vrot.slane %v1525, 4
      %v1529 = vsel %vm612, %v1527, 0.0
      %1530 = vadd.xlane.f32.xlu0 %v1529
      %v1531 = vpop.xlane.xlu0 %1530
      %v1532 = vrot.slane %v1531, 4
      %v1533 = vadd.f32 %v1531, %v1532
      %v1534 = vrot.slane %v1533, 2
      %v1535 = vadd.f32 %v1533, %v1534
      %v1536 = vrot.slane %v1535, 1
      %v1537 = vadd.f32 %v1535, %v1536
      %s1538 = vtos %v1537
      %v1539 = vstv %s1538
      %v1540 = vmul.f32 %v1539, 0.125
      %vm1541 = vcmask 0
      %1542 = vst.msk [vmem:[#allocation4] sm:$0x1] %vm1541, %v1540
      %v1543 = vrot.slane %v1455, 7
      %v1544 = vsel %vm1491, %v1543, %v1454
      %v1545 = vrot.slane %v1456, 6
      %v1546 = vsel %vm1494, %v1545, %v1544
      %v1547 = vrot.slane %v1457, 5
      %v1548 = vsel %vm1497, %v1547, %v1546
      %v1550 = vsel %vm612, %v1548, 0.0
      %1551 = vadd.xlane.f32.xlu0 %v1550
      %v1552 = vpop.xlane.xlu0 %1551
      %v1553 = vrot.slane %v1552, 4
      %v1554 = vadd.f32 %v1552, %v1553
      %v1555 = vrot.slane %v1554, 2
      %v1556 = vadd.f32 %v1554, %v1555
      %v1557 = vrot.slane %v1556, 1
      %v1558 = vadd.f32 %v1556, %v1557
      %s1559 = vtos %v1558
      %v1560 = vstv %s1559
      %1561 = vst.msk [vmem:[#allocation6] sm:$0x1] %vm1541, %v1560
      %v1566 = vrot.slane %v1475, 7
      %v1567 = vsel %vm1491, %v1566, %v1474
      %v1568 = vrot.slane %v1476, 6
      %v1569 = vsel %vm1494, %v1568, %v1567
      %v1570 = vrot.slane %v1477, 5
      %v1571 = vsel %vm1497, %v1570, %v1569
      %v1573 = vsel %vm612, %v1571, 0.0
      %1574 = vadd.xlane.f32.xlu0 %v1573
      %v1575 = vpop.xlane.xlu0 %1574
      %v1576 = vrot.slane %v1575, 4
      %v1577 = vadd.f32 %v1575, %v1576
      %v1578 = vrot.slane %v1577, 2
      %v1579 = vadd.f32 %v1577, %v1578
      %v1580 = vrot.slane %v1579, 1
      %v1581 = vadd.f32 %v1579, %v1580
      %s1582 = vtos %v1581
      %v1583 = vstv %s1582
      %1584 = vst.msk [vmem:[#allocation8] sm:$0x1] %vm1541, %v1583
    $region33: #{pt_forward_fused.1} parent=1 // pred_fallthru
      _
    // Predicated region
    $region34: #{pt_forward_fused.1} parent=1 // pred_check
      _
    $region35: #{pt_forward_fused.1} parent=1 // pred_check_branch
      %1586 = sbr.rel (0) target = $region37
    $region36: #{pt_forward_fused.1} parent=1 // pred_region
      %s1588 = ssub.s32 16, 16
      %1589 = vsyncadd [#allocation5], %s1588
      %s1591 = sshll.u32 [#allocation4], 4
      %s1592 = int_to_ptr.vmem [resolvable:$true] %s1591
      %1594 = dma.vmem_to_hbm [thread:$0]  %s1592, 16, %s6, [#allocation5]
    $region37: #{pt_forward_fused.1} parent=1 // pred_fallthru
      _
    // Predicated region
    $region38: #{pt_forward_fused.1} parent=1 // pred_check
      _
    $region39: #{pt_forward_fused.1} parent=1 // pred_check_branch
      %1596 = sbr.rel (0) target = $region41
    $region40: #{pt_forward_fused.1} parent=1 // pred_region
      %s1598 = ssub.s32 16, 16
      %1599 = vsyncadd [#allocation7], %s1598
      %s1601 = sshll.u32 [#allocation6], 4
      %s1602 = int_to_ptr.vmem [resolvable:$true] %s1601
      %1604 = dma.vmem_to_hbm [thread:$0]  %s1602, 16, %s7, [#allocation7]
    $region41: #{pt_forward_fused.1} parent=1 // pred_fallthru
      _
    // Predicated region
    $region42: #{pt_forward_fused.1} parent=1 // pred_check
      _
    $region43: #{pt_forward_fused.1} parent=1 // pred_check_branch
      %1606 = sbr.rel (0) target = $region45
    $region44: #{pt_forward_fused.1} parent=1 // pred_region
      %s1608 = ssub.s32 16, 16
      %1609 = vsyncadd [#allocation7], %s1608
      %s1611 = sshll.u32 [#allocation8], 4
      %s1612 = int_to_ptr.vmem [resolvable:$true] %s1611
      %1614 = dma.vmem_to_hbm [thread:$0]  %s1612, 16, %s8, [#allocation7]
    $region45: #{pt_forward_fused.1} parent=1 // pred_fallthru
      _
    // Predicated region
    $region46: #{pt_forward_fused.1} parent=1 // pred_check
      _
    $region47: #{pt_forward_fused.1} parent=1 // pred_check_branch
      %1616 = sbr.rel (0) target = $region49
    $region48: #{pt_forward_fused.1} parent=1 // pred_region
      %1617 = dma.done [#allocation5], 16
    $region49: #{pt_forward_fused.1} parent=1 // pred_fallthru
      _
    // Predicated region
    $region50: #{pt_forward_fused.1} parent=1 // pred_check
      _
    $region51: #{pt_forward_fused.1} parent=1 // pred_check_branch
      %1619 = sbr.rel (0) target = $region53
    $region52: #{pt_forward_fused.1} parent=1 // pred_region
      %1620 = dma.done [#allocation7], 16
    $region53: #{pt_forward_fused.1} parent=1 // pred_fallthru
      _
    // Predicated region
    $region54: #{pt_forward_fused.1} parent=1 // pred_check
      _
    $region55: #{pt_forward_fused.1} parent=1 // pred_check_branch
      %1622 = sbr.rel (0) target = $region57
    $region56: #{pt_forward_fused.1} parent=1 // pred_region
      %1623 = dma.done [#allocation7], 16
    $region57: #{pt_forward_fused.1} parent=1 // pred_fallthru
      _
    %1624 = vsyncpa [#allocation5], 1
    %1625 = vsyncpa [#allocation7], 1

</llo_original>
